<compile_context>
chip_gen: v6e
topology: v6e:2x2x1
jax: 0.10.0
libtpu: 0.0.40
codegen_flags: <defaults>
</compile_context>

<pallas_src>
import functools

import numpy as np
import jax
import jax.numpy as jnp
from jax.experimental import pallas as pl
from jax.experimental.pallas import tpu as pltpu

EPS = 1e-5


def _build_masks(idx_ref, D, H, W):
    """27 zero-padding border masks as (1, S) f32 (None when always valid)."""
    d_idx = idx_ref[0:1, :]
    h_idx = idx_ref[1:2, :]
    w_idx = idx_ref[2:3, :]
    masks = {}
    for dd in (-1, 0, 1):
        for dh in (-1, 0, 1):
            for dw in (-1, 0, 1):
                conds = []
                if dd == -1:
                    conds.append(d_idx >= 1)
                elif dd == 1:
                    conds.append(d_idx < D - 1)
                if dh == -1:
                    conds.append(h_idx >= 1)
                elif dh == 1:
                    conds.append(h_idx < H - 1)
                if dw == -1:
                    conds.append(w_idx >= 1)
                elif dw == 1:
                    conds.append(w_idx < W - 1)
                if not conds:
                    masks[(dd, dh, dw)] = None
                else:
                    m = conds[0]
                    for c in conds[1:]:
                        m = jnp.logical_and(m, c)
                    masks[(dd, dh, dw)] = m.astype(jnp.float32)
    return masks


def _conv3x3x3(x_cs, w2d, b_col, masks, D, H, W):
    """3x3x3 'SAME' conv as a single MXU matmul.

    x_cs : (C_in, S) f32, S = D*H*W flattened row-major (lane-dense)
    w2d  : (C_out, 27*C_in) f32, K ordered tap-major (kd,kh,kw), C_in-minor
    b_col: (C_out, 1) f32
    """
    S = x_cs.shape[-1]
    taps = []
    for kd in range(3):
        for kh in range(3):
            for kw in range(3):
                dd, dh, dw = kd - 1, kh - 1, kw - 1
                off = dd * H * W + dh * W + dw
                # rolled[c, p] == x_cs[c, (p + off) mod S]; for in-bounds taps the
                # flat index never wraps, out-of-bounds taps are zeroed by the mask.
                t = x_cs if off == 0 else pltpu.roll(x_cs, (-off) % S, axis=1)
                m = masks[(dd, dh, dw)]
                if m is not None:
                    t = t * m
                taps.append(t)
    p = jnp.concatenate(taps, axis=0)                            # (27*C_in, S)
    acc = jnp.dot(w2d, p, preferred_element_type=jnp.float32)    # (C_out, S)
    return acc + b_col


def _instnorm_relu(x_cs, inv_s):
    """InstanceNorm3d(affine=False, eps=1e-5, biased var) + ReLU on (C, S)."""
    mean = jnp.sum(x_cs, axis=1, keepdims=True) * inv_s
    msq = jnp.sum(x_cs * x_cs, axis=1, keepdims=True) * inv_s
    var = jnp.maximum(msq - mean * mean, 0.0)
    y = (x_cs - mean) * jax.lax.rsqrt(var + EPS)
    return jnp.maximum(y, 0.0)


def _double_conv_kernel(idx_ref, x_ref, w1_ref, b1_ref, w2_ref, b2_ref, o_ref,
                        *, D, H, W):
    # idx_ref: (3, S) int32   (d, h, w) coordinate of every flat position
    # x_ref  : (Cin, S)       one sample, channels on sublanes, space on lanes
    # w1_ref : (Cmid, 27*Cin) ; b1_ref: (Cmid, 1)
    # w2_ref : (Cout, 27*Cmid); b2_ref: (Cout, 1)
    # o_ref  : (Cout, S)
    S = D * H * W
    inv_s = 1.0 / S
    masks = _build_masks(idx_ref, D, H, W)

    x = x_ref[...].astype(jnp.float32)
    y1 = _instnorm_relu(
        _conv3x3x3(x, w1_ref[...], b1_ref[...], masks, D, H, W), inv_s)
    y2 = _instnorm_relu(
        _conv3x3x3(y1, w2_ref[...], b2_ref[...], masks, D, H, W), inv_s)
    o_ref[...] = y2.astype(o_ref.dtype)


@jax.jit
def double_conv(x_ncdhw, w1, b1, w2, b2):
    """x_ncdhw: (N, Cin, D, H, W) f32; w1/w2 in DHWIO (3,3,3,I,O); -> NCDHW."""
    N, Cin, D, H, W = x_ncdhw.shape
    Cmid = w1.shape[-1]
    Cout = w2.shape[-1]
    S = D * H * W

    x_flat = x_ncdhw.reshape(N, Cin, S).astype(jnp.float32)     # free reshape
    # (3,3,3,Cin,Cmid) -> (Cmid, 27*Cin), K tap-major / Cin-minor
    w1_2d = jnp.transpose(w1.reshape(27 * Cin, Cmid)).astype(jnp.float32)
    w2_2d = jnp.transpose(w2.reshape(27 * Cmid, Cout)).astype(jnp.float32)
    b1_col = b1.reshape(Cmid, 1).astype(jnp.float32)
    b2_col = b2.reshape(Cout, 1).astype(jnp.float32)

    # flat-position -> (d, h, w) coordinates for the in-kernel border masks
    d_i, h_i, w_i = np.meshgrid(np.arange(D), np.arange(H), np.arange(W),
                                indexing="ij")
    idx = jnp.asarray(np.stack([d_i, h_i, w_i]).reshape(3, S), dtype=jnp.int32)

    kernel = functools.partial(_double_conv_kernel, D=D, H=H, W=W)
    flops = 2 * N * S * 27 * (Cin * Cmid + Cmid * Cout)
    bytes_accessed = 4 * (N * Cin * S + N * Cout * S + 3 * S
                          + 27 * Cin * Cmid + 27 * Cmid * Cout + Cmid + Cout)

    out = pl.pallas_call(
        kernel,
        out_shape=jax.ShapeDtypeStruct((N, Cout, S), jnp.float32),
        grid_spec=pltpu.PrefetchScalarGridSpec(
            num_scalar_prefetch=0,
            grid=(N,),
            in_specs=[
                pl.BlockSpec((3, S), lambda n: (0, 0)),             # idx
                pl.BlockSpec((None, Cin, S), lambda n: (n, 0, 0)),  # x (1 sample)
                pl.BlockSpec((Cmid, 27 * Cin), lambda n: (0, 0)),   # w1
                pl.BlockSpec((Cmid, 1), lambda n: (0, 0)),          # b1
                pl.BlockSpec((Cout, 27 * Cmid), lambda n: (0, 0)),  # w2
                pl.BlockSpec((Cout, 1), lambda n: (0, 0)),          # b2
            ],
            out_specs=pl.BlockSpec((None, Cout, S), lambda n: (n, 0, 0)),
        ),
        compiler_params=pltpu.CompilerParams(
            dimension_semantics=("parallel",),
            vmem_limit_bytes=48 * 1024 * 1024,
        ),
        cost_estimate=pl.CostEstimate(
            flops=flops,
            transcendentals=2 * N * (Cmid + Cout),
            bytes_accessed=bytes_accessed,
        ),
    )(idx, x_flat, w1_2d, b1_col, w2_2d, b2_col)

    return out.reshape(N, Cout, D, H, W)


# ----------------------------- pure-JAX reference ----------------------------
def _instance_norm_ref(y):
    mean = jnp.mean(y, axis=(1, 2, 3), keepdims=True)
    var = jnp.mean((y - mean) ** 2, axis=(1, 2, 3), keepdims=True)
    return (y - mean) * jax.lax.rsqrt(var + EPS)


def double_conv_ref(x_ncdhw, w1, b1, w2, b2):
    """Reference via lax.conv (channels-last), returns NCDHW."""
    x = jnp.transpose(x_ncdhw, (0, 2, 3, 4, 1))
    dn1 = jax.lax.conv_dimension_numbers(x.shape, w1.shape,
                                         ('NDHWC', 'DHWIO', 'NDHWC'))
    y = jax.lax.conv_general_dilated(x, w1, (1, 1, 1), 'SAME',
                                     dimension_numbers=dn1,
                                     precision=jax.lax.Precision.HIGHEST)
    y = y + b1[None, None, None, None, :]
    y = jnp.maximum(_instance_norm_ref(y), 0.0)
    dn2 = jax.lax.conv_dimension_numbers(y.shape, w2.shape,
                                         ('NDHWC', 'DHWIO', 'NDHWC'))
    z = jax.lax.conv_general_dilated(y, w2, (1, 1, 1), 'SAME',
                                     dimension_numbers=dn2,
                                     precision=jax.lax.Precision.HIGHEST)
    z = z + b2[None, None, None, None, :]
    z = jnp.maximum(_instance_norm_ref(z), 0.0)
    return jnp.transpose(z, (0, 4, 1, 2, 3))


if __name__ == "__main__":
    # DoubleConv(in_ch=8, out_ch=16) on x: (N=2, 8, 8, 8, 8).
    # Channel counts chosen as multiples of 8 so the (C, S) sublane layout and
    # the im2col concat are tile-aligned.
    N, Cin, Cout, D, H, W = 2, 8, 16, 8, 8, 8

    key = jax.random.PRNGKey(0)
    k_x, k_w1, k_b1, k_w2, k_b2 = jax.random.split(key, 5)

    x = jax.random.normal(k_x, (N, Cin, D, H, W), dtype=jnp.float32)
    # weights in DHWIO (3,3,3,in,out); deterministic synthetic init
    w1 = jax.random.normal(k_w1, (3, 3, 3, Cin, Cout), dtype=jnp.float32) * 0.1
    b1 = jax.random.normal(k_b1, (Cout,), dtype=jnp.float32) * 0.1
    w2 = jax.random.normal(k_w2, (3, 3, 3, Cout, Cout), dtype=jnp.float32) * 0.1
    b2 = jax.random.normal(k_b2, (Cout,), dtype=jnp.float32) * 0.1

    out = jax.block_until_ready(double_conv(x, w1, b1, w2, b2))
    ref = jax.block_until_ready(double_conv_ref(x, w1, b1, w2, b2))

    assert out.shape == (N, Cout, D, H, W)
    assert jnp.allclose(out, ref, atol=2e-3, rtol=2e-3), \
        f"mismatch vs JAX reference, max abs err {jnp.max(jnp.abs(out - ref))}"

    print("KERNEL_OK")
</pallas_src>

<mosaic_0001>
module attributes {stable_mosaic.version = 11 : i64} {
  func.func @_double_conv_kernel(%arg0: i32, %arg1: memref<3x512xi32, #tpu.memory_space<vmem>>, %arg2: memref<1x8x512xf32, #tpu.memory_space<vmem>>, %arg3: memref<16x216xf32, #tpu.memory_space<vmem>>, %arg4: memref<16x1xf32, #tpu.memory_space<vmem>>, %arg5: memref<16x432xf32, #tpu.memory_space<vmem>>, %arg6: memref<16x1xf32, #tpu.memory_space<vmem>>, %arg7: memref<1x16x512xf32, #tpu.memory_space<vmem>>) attributes {dimension_semantics = [#tpu.dimension_semantics<parallel>], iteration_bounds = array<i64: 2>, scalar_prefetch = 0 : i64, scratch_operands = 0 : i64, tpu.core_type = #tpu.core_type<tc>, window_params = [{pipeline_mode = #tpu.pipeline_mode<synchronous>, transform_indices = @transform_0, window_bounds = array<i64: 3, 512>}, {transform_indices = @transform_1, window_bounds = array<i64: 1, 8, 512>}, {pipeline_mode = #tpu.pipeline_mode<synchronous>, transform_indices = @transform_2, window_bounds = array<i64: 16, 216>}, {pipeline_mode = #tpu.pipeline_mode<synchronous>, transform_indices = @transform_3, window_bounds = array<i64: 16, 1>}, {pipeline_mode = #tpu.pipeline_mode<synchronous>, transform_indices = @transform_4, window_bounds = array<i64: 16, 432>}, {pipeline_mode = #tpu.pipeline_mode<synchronous>, transform_indices = @transform_5, window_bounds = array<i64: 16, 1>}, {transform_indices = @transform_6, window_bounds = array<i64: 1, 16, 512>}]} {
    %c0 = arith.constant 0 : index
    %c0_0 = arith.constant 0 : index
    %0 = vector.load %arg1[%c0, %c0_0] : memref<3x512xi32, #tpu.memory_space<vmem>>, vector<1x512xi32>
    %c1 = arith.constant 1 : index
    %c0_1 = arith.constant 0 : index
    %1 = vector.load %arg1[%c1, %c0_1] : memref<3x512xi32, #tpu.memory_space<vmem>>, vector<1x512xi32>
    %c2 = arith.constant 2 : index
    %c0_2 = arith.constant 0 : index
    %2 = vector.load %arg1[%c2, %c0_2] : memref<3x512xi32, #tpu.memory_space<vmem>>, vector<1x512xi32>
    %c1_i32 = arith.constant 1 : i32
    %3 = vector.broadcast %c1_i32 : i32 to vector<1x512xi32>
    %4 = arith.cmpi sge, %0, %3 : vector<1x512xi32>
    %c1_i32_3 = arith.constant 1 : i32
    %5 = vector.broadcast %c1_i32_3 : i32 to vector<1x512xi32>
    %6 = arith.cmpi sge, %1, %5 : vector<1x512xi32>
    %c1_i32_4 = arith.constant 1 : i32
    %7 = vector.broadcast %c1_i32_4 : i32 to vector<1x512xi32>
    %8 = arith.cmpi sge, %2, %7 : vector<1x512xi32>
    %9 = arith.andi %4, %6 : vector<1x512xi1>
    %10 = arith.andi %9, %8 : vector<1x512xi1>
    %11 = arith.extui %10 : vector<1x512xi1> to vector<1x512xi32>
    %12 = arith.sitofp %11 : vector<1x512xi32> to vector<1x512xf32>
    %c1_i32_5 = arith.constant 1 : i32
    %13 = vector.broadcast %c1_i32_5 : i32 to vector<1x512xi32>
    %14 = arith.cmpi sge, %0, %13 : vector<1x512xi32>
    %c1_i32_6 = arith.constant 1 : i32
    %15 = vector.broadcast %c1_i32_6 : i32 to vector<1x512xi32>
    %16 = arith.cmpi sge, %1, %15 : vector<1x512xi32>
    %17 = arith.andi %14, %16 : vector<1x512xi1>
    %18 = arith.extui %17 : vector<1x512xi1> to vector<1x512xi32>
    %19 = arith.sitofp %18 : vector<1x512xi32> to vector<1x512xf32>
    %c1_i32_7 = arith.constant 1 : i32
    %20 = vector.broadcast %c1_i32_7 : i32 to vector<1x512xi32>
    %21 = arith.cmpi sge, %0, %20 : vector<1x512xi32>
    %c1_i32_8 = arith.constant 1 : i32
    %22 = vector.broadcast %c1_i32_8 : i32 to vector<1x512xi32>
    %23 = arith.cmpi sge, %1, %22 : vector<1x512xi32>
    %c7_i32 = arith.constant 7 : i32
    %24 = vector.broadcast %c7_i32 : i32 to vector<1x512xi32>
    %25 = arith.cmpi slt, %2, %24 : vector<1x512xi32>
    %26 = arith.andi %21, %23 : vector<1x512xi1>
    %27 = arith.andi %26, %25 : vector<1x512xi1>
    %28 = arith.extui %27 : vector<1x512xi1> to vector<1x512xi32>
    %29 = arith.sitofp %28 : vector<1x512xi32> to vector<1x512xf32>
    %c1_i32_9 = arith.constant 1 : i32
    %30 = vector.broadcast %c1_i32_9 : i32 to vector<1x512xi32>
    %31 = arith.cmpi sge, %0, %30 : vector<1x512xi32>
    %c1_i32_10 = arith.constant 1 : i32
    %32 = vector.broadcast %c1_i32_10 : i32 to vector<1x512xi32>
    %33 = arith.cmpi sge, %2, %32 : vector<1x512xi32>
    %34 = arith.andi %31, %33 : vector<1x512xi1>
    %35 = arith.extui %34 : vector<1x512xi1> to vector<1x512xi32>
    %36 = arith.sitofp %35 : vector<1x512xi32> to vector<1x512xf32>
    %c1_i32_11 = arith.constant 1 : i32
    %37 = vector.broadcast %c1_i32_11 : i32 to vector<1x512xi32>
    %38 = arith.cmpi sge, %0, %37 : vector<1x512xi32>
    %39 = arith.extui %38 : vector<1x512xi1> to vector<1x512xi32>
    %40 = arith.sitofp %39 : vector<1x512xi32> to vector<1x512xf32>
    %c1_i32_12 = arith.constant 1 : i32
    %41 = vector.broadcast %c1_i32_12 : i32 to vector<1x512xi32>
    %42 = arith.cmpi sge, %0, %41 : vector<1x512xi32>
    %c7_i32_13 = arith.constant 7 : i32
    %43 = vector.broadcast %c7_i32_13 : i32 to vector<1x512xi32>
    %44 = arith.cmpi slt, %2, %43 : vector<1x512xi32>
    %45 = arith.andi %42, %44 : vector<1x512xi1>
    %46 = arith.extui %45 : vector<1x512xi1> to vector<1x512xi32>
    %47 = arith.sitofp %46 : vector<1x512xi32> to vector<1x512xf32>
    %c1_i32_14 = arith.constant 1 : i32
    %48 = vector.broadcast %c1_i32_14 : i32 to vector<1x512xi32>
    %49 = arith.cmpi sge, %0, %48 : vector<1x512xi32>
    %c7_i32_15 = arith.constant 7 : i32
    %50 = vector.broadcast %c7_i32_15 : i32 to vector<1x512xi32>
    %51 = arith.cmpi slt, %1, %50 : vector<1x512xi32>
    %c1_i32_16 = arith.constant 1 : i32
    %52 = vector.broadcast %c1_i32_16 : i32 to vector<1x512xi32>
    %53 = arith.cmpi sge, %2, %52 : vector<1x512xi32>
    %54 = arith.andi %49, %51 : vector<1x512xi1>
    %55 = arith.andi %54, %53 : vector<1x512xi1>
    %56 = arith.extui %55 : vector<1x512xi1> to vector<1x512xi32>
    %57 = arith.sitofp %56 : vector<1x512xi32> to vector<1x512xf32>
    %c1_i32_17 = arith.constant 1 : i32
    %58 = vector.broadcast %c1_i32_17 : i32 to vector<1x512xi32>
    %59 = arith.cmpi sge, %0, %58 : vector<1x512xi32>
    %c7_i32_18 = arith.constant 7 : i32
    %60 = vector.broadcast %c7_i32_18 : i32 to vector<1x512xi32>
    %61 = arith.cmpi slt, %1, %60 : vector<1x512xi32>
    %62 = arith.andi %59, %61 : vector<1x512xi1>
    %63 = arith.extui %62 : vector<1x512xi1> to vector<1x512xi32>
    %64 = arith.sitofp %63 : vector<1x512xi32> to vector<1x512xf32>
    %c1_i32_19 = arith.constant 1 : i32
    %65 = vector.broadcast %c1_i32_19 : i32 to vector<1x512xi32>
    %66 = arith.cmpi sge, %0, %65 : vector<1x512xi32>
    %c7_i32_20 = arith.constant 7 : i32
    %67 = vector.broadcast %c7_i32_20 : i32 to vector<1x512xi32>
    %68 = arith.cmpi slt, %1, %67 : vector<1x512xi32>
    %c7_i32_21 = arith.constant 7 : i32
    %69 = vector.broadcast %c7_i32_21 : i32 to vector<1x512xi32>
    %70 = arith.cmpi slt, %2, %69 : vector<1x512xi32>
    %71 = arith.andi %66, %68 : vector<1x512xi1>
    %72 = arith.andi %71, %70 : vector<1x512xi1>
    %73 = arith.extui %72 : vector<1x512xi1> to vector<1x512xi32>
    %74 = arith.sitofp %73 : vector<1x512xi32> to vector<1x512xf32>
    %c1_i32_22 = arith.constant 1 : i32
    %75 = vector.broadcast %c1_i32_22 : i32 to vector<1x512xi32>
    %76 = arith.cmpi sge, %1, %75 : vector<1x512xi32>
    %c1_i32_23 = arith.constant 1 : i32
    %77 = vector.broadcast %c1_i32_23 : i32 to vector<1x512xi32>
    %78 = arith.cmpi sge, %2, %77 : vector<1x512xi32>
    %79 = arith.andi %76, %78 : vector<1x512xi1>
    %80 = arith.extui %79 : vector<1x512xi1> to vector<1x512xi32>
    %81 = arith.sitofp %80 : vector<1x512xi32> to vector<1x512xf32>
    %c1_i32_24 = arith.constant 1 : i32
    %82 = vector.broadcast %c1_i32_24 : i32 to vector<1x512xi32>
    %83 = arith.cmpi sge, %1, %82 : vector<1x512xi32>
    %84 = arith.extui %83 : vector<1x512xi1> to vector<1x512xi32>
    %85 = arith.sitofp %84 : vector<1x512xi32> to vector<1x512xf32>
    %c1_i32_25 = arith.constant 1 : i32
    %86 = vector.broadcast %c1_i32_25 : i32 to vector<1x512xi32>
    %87 = arith.cmpi sge, %1, %86 : vector<1x512xi32>
    %c7_i32_26 = arith.constant 7 : i32
    %88 = vector.broadcast %c7_i32_26 : i32 to vector<1x512xi32>
    %89 = arith.cmpi slt, %2, %88 : vector<1x512xi32>
    %90 = arith.andi %87, %89 : vector<1x512xi1>
    %91 = arith.extui %90 : vector<1x512xi1> to vector<1x512xi32>
    %92 = arith.sitofp %91 : vector<1x512xi32> to vector<1x512xf32>
    %c1_i32_27 = arith.constant 1 : i32
    %93 = vector.broadcast %c1_i32_27 : i32 to vector<1x512xi32>
    %94 = arith.cmpi sge, %2, %93 : vector<1x512xi32>
    %95 = arith.extui %94 : vector<1x512xi1> to vector<1x512xi32>
    %96 = arith.sitofp %95 : vector<1x512xi32> to vector<1x512xf32>
    %c7_i32_28 = arith.constant 7 : i32
    %97 = vector.broadcast %c7_i32_28 : i32 to vector<1x512xi32>
    %98 = arith.cmpi slt, %2, %97 : vector<1x512xi32>
    %99 = arith.extui %98 : vector<1x512xi1> to vector<1x512xi32>
    %100 = arith.sitofp %99 : vector<1x512xi32> to vector<1x512xf32>
    %c7_i32_29 = arith.constant 7 : i32
    %101 = vector.broadcast %c7_i32_29 : i32 to vector<1x512xi32>
    %102 = arith.cmpi slt, %1, %101 : vector<1x512xi32>
    %c1_i32_30 = arith.constant 1 : i32
    %103 = vector.broadcast %c1_i32_30 : i32 to vector<1x512xi32>
    %104 = arith.cmpi sge, %2, %103 : vector<1x512xi32>
    %105 = arith.andi %102, %104 : vector<1x512xi1>
    %106 = arith.extui %105 : vector<1x512xi1> to vector<1x512xi32>
    %107 = arith.sitofp %106 : vector<1x512xi32> to vector<1x512xf32>
    %c7_i32_31 = arith.constant 7 : i32
    %108 = vector.broadcast %c7_i32_31 : i32 to vector<1x512xi32>
    %109 = arith.cmpi slt, %1, %108 : vector<1x512xi32>
    %110 = arith.extui %109 : vector<1x512xi1> to vector<1x512xi32>
    %111 = arith.sitofp %110 : vector<1x512xi32> to vector<1x512xf32>
    %c7_i32_32 = arith.constant 7 : i32
    %112 = vector.broadcast %c7_i32_32 : i32 to vector<1x512xi32>
    %113 = arith.cmpi slt, %1, %112 : vector<1x512xi32>
    %c7_i32_33 = arith.constant 7 : i32
    %114 = vector.broadcast %c7_i32_33 : i32 to vector<1x512xi32>
    %115 = arith.cmpi slt, %2, %114 : vector<1x512xi32>
    %116 = arith.andi %113, %115 : vector<1x512xi1>
    %117 = arith.extui %116 : vector<1x512xi1> to vector<1x512xi32>
    %118 = arith.sitofp %117 : vector<1x512xi32> to vector<1x512xf32>
    %c7_i32_34 = arith.constant 7 : i32
    %119 = vector.broadcast %c7_i32_34 : i32 to vector<1x512xi32>
    %120 = arith.cmpi slt, %0, %119 : vector<1x512xi32>
    %c1_i32_35 = arith.constant 1 : i32
    %121 = vector.broadcast %c1_i32_35 : i32 to vector<1x512xi32>
    %122 = arith.cmpi sge, %1, %121 : vector<1x512xi32>
    %c1_i32_36 = arith.constant 1 : i32
    %123 = vector.broadcast %c1_i32_36 : i32 to vector<1x512xi32>
    %124 = arith.cmpi sge, %2, %123 : vector<1x512xi32>
    %125 = arith.andi %120, %122 : vector<1x512xi1>
    %126 = arith.andi %125, %124 : vector<1x512xi1>
    %127 = arith.extui %126 : vector<1x512xi1> to vector<1x512xi32>
    %128 = arith.sitofp %127 : vector<1x512xi32> to vector<1x512xf32>
    %c7_i32_37 = arith.constant 7 : i32
    %129 = vector.broadcast %c7_i32_37 : i32 to vector<1x512xi32>
    %130 = arith.cmpi slt, %0, %129 : vector<1x512xi32>
    %c1_i32_38 = arith.constant 1 : i32
    %131 = vector.broadcast %c1_i32_38 : i32 to vector<1x512xi32>
    %132 = arith.cmpi sge, %1, %131 : vector<1x512xi32>
    %133 = arith.andi %130, %132 : vector<1x512xi1>
    %134 = arith.extui %133 : vector<1x512xi1> to vector<1x512xi32>
    %135 = arith.sitofp %134 : vector<1x512xi32> to vector<1x512xf32>
    %c7_i32_39 = arith.constant 7 : i32
    %136 = vector.broadcast %c7_i32_39 : i32 to vector<1x512xi32>
    %137 = arith.cmpi slt, %0, %136 : vector<1x512xi32>
    %c1_i32_40 = arith.constant 1 : i32
    %138 = vector.broadcast %c1_i32_40 : i32 to vector<1x512xi32>
    %139 = arith.cmpi sge, %1, %138 : vector<1x512xi32>
    %c7_i32_41 = arith.constant 7 : i32
    %140 = vector.broadcast %c7_i32_41 : i32 to vector<1x512xi32>
    %141 = arith.cmpi slt, %2, %140 : vector<1x512xi32>
    %142 = arith.andi %137, %139 : vector<1x512xi1>
    %143 = arith.andi %142, %141 : vector<1x512xi1>
    %144 = arith.extui %143 : vector<1x512xi1> to vector<1x512xi32>
    %145 = arith.sitofp %144 : vector<1x512xi32> to vector<1x512xf32>
    %c7_i32_42 = arith.constant 7 : i32
    %146 = vector.broadcast %c7_i32_42 : i32 to vector<1x512xi32>
    %147 = arith.cmpi slt, %0, %146 : vector<1x512xi32>
    %c1_i32_43 = arith.constant 1 : i32
    %148 = vector.broadcast %c1_i32_43 : i32 to vector<1x512xi32>
    %149 = arith.cmpi sge, %2, %148 : vector<1x512xi32>
    %150 = arith.andi %147, %149 : vector<1x512xi1>
    %151 = arith.extui %150 : vector<1x512xi1> to vector<1x512xi32>
    %152 = arith.sitofp %151 : vector<1x512xi32> to vector<1x512xf32>
    %c7_i32_44 = arith.constant 7 : i32
    %153 = vector.broadcast %c7_i32_44 : i32 to vector<1x512xi32>
    %154 = arith.cmpi slt, %0, %153 : vector<1x512xi32>
    %155 = arith.extui %154 : vector<1x512xi1> to vector<1x512xi32>
    %156 = arith.sitofp %155 : vector<1x512xi32> to vector<1x512xf32>
    %c7_i32_45 = arith.constant 7 : i32
    %157 = vector.broadcast %c7_i32_45 : i32 to vector<1x512xi32>
    %158 = arith.cmpi slt, %0, %157 : vector<1x512xi32>
    %c7_i32_46 = arith.constant 7 : i32
    %159 = vector.broadcast %c7_i32_46 : i32 to vector<1x512xi32>
    %160 = arith.cmpi slt, %2, %159 : vector<1x512xi32>
    %161 = arith.andi %158, %160 : vector<1x512xi1>
    %162 = arith.extui %161 : vector<1x512xi1> to vector<1x512xi32>
    %163 = arith.sitofp %162 : vector<1x512xi32> to vector<1x512xf32>
    %c7_i32_47 = arith.constant 7 : i32
    %164 = vector.broadcast %c7_i32_47 : i32 to vector<1x512xi32>
    %165 = arith.cmpi slt, %0, %164 : vector<1x512xi32>
    %c7_i32_48 = arith.constant 7 : i32
    %166 = vector.broadcast %c7_i32_48 : i32 to vector<1x512xi32>
    %167 = arith.cmpi slt, %1, %166 : vector<1x512xi32>
    %c1_i32_49 = arith.constant 1 : i32
    %168 = vector.broadcast %c1_i32_49 : i32 to vector<1x512xi32>
    %169 = arith.cmpi sge, %2, %168 : vector<1x512xi32>
    %170 = arith.andi %165, %167 : vector<1x512xi1>
    %171 = arith.andi %170, %169 : vector<1x512xi1>
    %172 = arith.extui %171 : vector<1x512xi1> to vector<1x512xi32>
    %173 = arith.sitofp %172 : vector<1x512xi32> to vector<1x512xf32>
    %c7_i32_50 = arith.constant 7 : i32
    %174 = vector.broadcast %c7_i32_50 : i32 to vector<1x512xi32>
    %175 = arith.cmpi slt, %0, %174 : vector<1x512xi32>
    %c7_i32_51 = arith.constant 7 : i32
    %176 = vector.broadcast %c7_i32_51 : i32 to vector<1x512xi32>
    %177 = arith.cmpi slt, %1, %176 : vector<1x512xi32>
    %178 = arith.andi %175, %177 : vector<1x512xi1>
    %179 = arith.extui %178 : vector<1x512xi1> to vector<1x512xi32>
    %180 = arith.sitofp %179 : vector<1x512xi32> to vector<1x512xf32>
    %c7_i32_52 = arith.constant 7 : i32
    %181 = vector.broadcast %c7_i32_52 : i32 to vector<1x512xi32>
    %182 = arith.cmpi slt, %0, %181 : vector<1x512xi32>
    %c7_i32_53 = arith.constant 7 : i32
    %183 = vector.broadcast %c7_i32_53 : i32 to vector<1x512xi32>
    %184 = arith.cmpi slt, %1, %183 : vector<1x512xi32>
    %c7_i32_54 = arith.constant 7 : i32
    %185 = vector.broadcast %c7_i32_54 : i32 to vector<1x512xi32>
    %186 = arith.cmpi slt, %2, %185 : vector<1x512xi32>
    %187 = arith.andi %182, %184 : vector<1x512xi1>
    %188 = arith.andi %187, %186 : vector<1x512xi1>
    %189 = arith.extui %188 : vector<1x512xi1> to vector<1x512xi32>
    %190 = arith.sitofp %189 : vector<1x512xi32> to vector<1x512xf32>
    %c0_55 = arith.constant 0 : index
    %c0_56 = arith.constant 0 : index
    %c0_57 = arith.constant 0 : index
    %191 = vector.load %arg2[%c0_55, %c0_56, %c0_57] : memref<1x8x512xf32, #tpu.memory_space<vmem>>, vector<1x8x512xf32>
    %192 = vector.shape_cast %191 : vector<1x8x512xf32> to vector<8x512xf32>
    %c0_58 = arith.constant 0 : index
    %c0_59 = arith.constant 0 : index
    %193 = vector.load %arg3[%c0_58, %c0_59] : memref<16x216xf32, #tpu.memory_space<vmem>>, vector<16x216xf32>
    %c0_60 = arith.constant 0 : index
    %c0_61 = arith.constant 0 : index
    %194 = vector.load %arg4[%c0_60, %c0_61] : memref<16x1xf32, #tpu.memory_space<vmem>>, vector<16x1xf32>
    %c73_i32 = arith.constant 73 : i32
    %195 = tpu.dynamic_rotate %192 by %c73_i32 dim 1 : vector<8x512xf32>, i32 -> vector<8x512xf32>
    %196 = vector.broadcast %12 : vector<1x512xf32> to vector<8x512xf32>
    %197 = arith.mulf %195, %196 : vector<8x512xf32>
    %c72_i32 = arith.constant 72 : i32
    %198 = tpu.dynamic_rotate %192 by %c72_i32 dim 1 : vector<8x512xf32>, i32 -> vector<8x512xf32>
    %199 = vector.broadcast %19 : vector<1x512xf32> to vector<8x512xf32>
    %200 = arith.mulf %198, %199 : vector<8x512xf32>
    %c71_i32 = arith.constant 71 : i32
    %201 = tpu.dynamic_rotate %192 by %c71_i32 dim 1 : vector<8x512xf32>, i32 -> vector<8x512xf32>
    %202 = vector.broadcast %29 : vector<1x512xf32> to vector<8x512xf32>
    %203 = arith.mulf %201, %202 : vector<8x512xf32>
    %c65_i32 = arith.constant 65 : i32
    %204 = tpu.dynamic_rotate %192 by %c65_i32 dim 1 : vector<8x512xf32>, i32 -> vector<8x512xf32>
    %205 = vector.broadcast %36 : vector<1x512xf32> to vector<8x512xf32>
    %206 = arith.mulf %204, %205 : vector<8x512xf32>
    %c64_i32 = arith.constant 64 : i32
    %207 = tpu.dynamic_rotate %192 by %c64_i32 dim 1 : vector<8x512xf32>, i32 -> vector<8x512xf32>
    %208 = vector.broadcast %40 : vector<1x512xf32> to vector<8x512xf32>
    %209 = arith.mulf %207, %208 : vector<8x512xf32>
    %c63_i32 = arith.constant 63 : i32
    %210 = tpu.dynamic_rotate %192 by %c63_i32 dim 1 : vector<8x512xf32>, i32 -> vector<8x512xf32>
    %211 = vector.broadcast %47 : vector<1x512xf32> to vector<8x512xf32>
    %212 = arith.mulf %210, %211 : vector<8x512xf32>
    %c57_i32 = arith.constant 57 : i32
    %213 = tpu.dynamic_rotate %192 by %c57_i32 dim 1 : vector<8x512xf32>, i32 -> vector<8x512xf32>
    %214 = vector.broadcast %57 : vector<1x512xf32> to vector<8x512xf32>
    %215 = arith.mulf %213, %214 : vector<8x512xf32>
    %c56_i32 = arith.constant 56 : i32
    %216 = tpu.dynamic_rotate %192 by %c56_i32 dim 1 : vector<8x512xf32>, i32 -> vector<8x512xf32>
    %217 = vector.broadcast %64 : vector<1x512xf32> to vector<8x512xf32>
    %218 = arith.mulf %216, %217 : vector<8x512xf32>
    %c55_i32 = arith.constant 55 : i32
    %219 = tpu.dynamic_rotate %192 by %c55_i32 dim 1 : vector<8x512xf32>, i32 -> vector<8x512xf32>
    %220 = vector.broadcast %74 : vector<1x512xf32> to vector<8x512xf32>
    %221 = arith.mulf %219, %220 : vector<8x512xf32>
    %c9_i32 = arith.constant 9 : i32
    %222 = tpu.dynamic_rotate %192 by %c9_i32 dim 1 : vector<8x512xf32>, i32 -> vector<8x512xf32>
    %223 = vector.broadcast %81 : vector<1x512xf32> to vector<8x512xf32>
    %224 = arith.mulf %222, %223 : vector<8x512xf32>
    %c8_i32 = arith.constant 8 : i32
    %225 = tpu.dynamic_rotate %192 by %c8_i32 dim 1 : vector<8x512xf32>, i32 -> vector<8x512xf32>
    %226 = vector.broadcast %85 : vector<1x512xf32> to vector<8x512xf32>
    %227 = arith.mulf %225, %226 : vector<8x512xf32>
    %c7_i32_62 = arith.constant 7 : i32
    %228 = tpu.dynamic_rotate %192 by %c7_i32_62 dim 1 : vector<8x512xf32>, i32 -> vector<8x512xf32>
    %229 = vector.broadcast %92 : vector<1x512xf32> to vector<8x512xf32>
    %230 = arith.mulf %228, %229 : vector<8x512xf32>
    %c1_i32_63 = arith.constant 1 : i32
    %231 = tpu.dynamic_rotate %192 by %c1_i32_63 dim 1 : vector<8x512xf32>, i32 -> vector<8x512xf32>
    %232 = vector.broadcast %96 : vector<1x512xf32> to vector<8x512xf32>
    %233 = arith.mulf %231, %232 : vector<8x512xf32>
    %c511_i32 = arith.constant 511 : i32
    %234 = tpu.dynamic_rotate %192 by %c511_i32 dim 1 : vector<8x512xf32>, i32 -> vector<8x512xf32>
    %235 = vector.broadcast %100 : vector<1x512xf32> to vector<8x512xf32>
    %236 = arith.mulf %234, %235 : vector<8x512xf32>
    %c505_i32 = arith.constant 505 : i32
    %237 = tpu.dynamic_rotate %192 by %c505_i32 dim 1 : vector<8x512xf32>, i32 -> vector<8x512xf32>
    %238 = vector.broadcast %107 : vector<1x512xf32> to vector<8x512xf32>
    %239 = arith.mulf %237, %238 : vector<8x512xf32>
    %c504_i32 = arith.constant 504 : i32
    %240 = tpu.dynamic_rotate %192 by %c504_i32 dim 1 : vector<8x512xf32>, i32 -> vector<8x512xf32>
    %241 = vector.broadcast %111 : vector<1x512xf32> to vector<8x512xf32>
    %242 = arith.mulf %240, %241 : vector<8x512xf32>
    %c503_i32 = arith.constant 503 : i32
    %243 = tpu.dynamic_rotate %192 by %c503_i32 dim 1 : vector<8x512xf32>, i32 -> vector<8x512xf32>
    %244 = vector.broadcast %118 : vector<1x512xf32> to vector<8x512xf32>
    %245 = arith.mulf %243, %244 : vector<8x512xf32>
    %c457_i32 = arith.constant 457 : i32
    %246 = tpu.dynamic_rotate %192 by %c457_i32 dim 1 : vector<8x512xf32>, i32 -> vector<8x512xf32>
    %247 = vector.broadcast %128 : vector<1x512xf32> to vector<8x512xf32>
    %248 = arith.mulf %246, %247 : vector<8x512xf32>
    %c456_i32 = arith.constant 456 : i32
    %249 = tpu.dynamic_rotate %192 by %c456_i32 dim 1 : vector<8x512xf32>, i32 -> vector<8x512xf32>
    %250 = vector.broadcast %135 : vector<1x512xf32> to vector<8x512xf32>
    %251 = arith.mulf %249, %250 : vector<8x512xf32>
    %c455_i32 = arith.constant 455 : i32
    %252 = tpu.dynamic_rotate %192 by %c455_i32 dim 1 : vector<8x512xf32>, i32 -> vector<8x512xf32>
    %253 = vector.broadcast %145 : vector<1x512xf32> to vector<8x512xf32>
    %254 = arith.mulf %252, %253 : vector<8x512xf32>
    %c449_i32 = arith.constant 449 : i32
    %255 = tpu.dynamic_rotate %192 by %c449_i32 dim 1 : vector<8x512xf32>, i32 -> vector<8x512xf32>
    %256 = vector.broadcast %152 : vector<1x512xf32> to vector<8x512xf32>
    %257 = arith.mulf %255, %256 : vector<8x512xf32>
    %c448_i32 = arith.constant 448 : i32
    %258 = tpu.dynamic_rotate %192 by %c448_i32 dim 1 : vector<8x512xf32>, i32 -> vector<8x512xf32>
    %259 = vector.broadcast %156 : vector<1x512xf32> to vector<8x512xf32>
    %260 = arith.mulf %258, %259 : vector<8x512xf32>
    %c447_i32 = arith.constant 447 : i32
    %261 = tpu.dynamic_rotate %192 by %c447_i32 dim 1 : vector<8x512xf32>, i32 -> vector<8x512xf32>
    %262 = vector.broadcast %163 : vector<1x512xf32> to vector<8x512xf32>
    %263 = arith.mulf %261, %262 : vector<8x512xf32>
    %c441_i32 = arith.constant 441 : i32
    %264 = tpu.dynamic_rotate %192 by %c441_i32 dim 1 : vector<8x512xf32>, i32 -> vector<8x512xf32>
    %265 = vector.broadcast %173 : vector<1x512xf32> to vector<8x512xf32>
    %266 = arith.mulf %264, %265 : vector<8x512xf32>
    %c440_i32 = arith.constant 440 : i32
    %267 = tpu.dynamic_rotate %192 by %c440_i32 dim 1 : vector<8x512xf32>, i32 -> vector<8x512xf32>
    %268 = vector.broadcast %180 : vector<1x512xf32> to vector<8x512xf32>
    %269 = arith.mulf %267, %268 : vector<8x512xf32>
    %c439_i32 = arith.constant 439 : i32
    %270 = tpu.dynamic_rotate %192 by %c439_i32 dim 1 : vector<8x512xf32>, i32 -> vector<8x512xf32>
    %271 = vector.broadcast %190 : vector<1x512xf32> to vector<8x512xf32>
    %272 = arith.mulf %270, %271 : vector<8x512xf32>
    %273 = tpu.concatenate %197, %200, %203, %206, %209, %212, %215, %218, %221, %224, %227, %230, %233, %192, %236, %239 in 0 : vector<8x512xf32>, vector<8x512xf32>, vector<8x512xf32>, vector<8x512xf32>, vector<8x512xf32>, vector<8x512xf32>, vector<8x512xf32>, vector<8x512xf32>, vector<8x512xf32>, vector<8x512xf32>, vector<8x512xf32>, vector<8x512xf32>, vector<8x512xf32>, vector<8x512xf32>, vector<8x512xf32>, vector<8x512xf32> -> vector<128x512xf32>
    %274 = tpu.concatenate %242, %245, %248, %251, %254, %257, %260, %263, %266, %269, %272 in 0 : vector<8x512xf32>, vector<8x512xf32>, vector<8x512xf32>, vector<8x512xf32>, vector<8x512xf32>, vector<8x512xf32>, vector<8x512xf32>, vector<8x512xf32>, vector<8x512xf32>, vector<8x512xf32>, vector<8x512xf32> -> vector<88x512xf32>
    %275 = tpu.concatenate %273, %274 in 0 : vector<128x512xf32>, vector<88x512xf32> -> vector<216x512xf32>
    %cst = arith.constant dense<0.000000e+00> : vector<16x512xf32>
    %276 = tpu.matmul %193, %275, %cst {dimension_numbers = #tpu.dot_dimension_numbers<[1], [0], [0], [1], [0, 0, 1, 1], [], []>} : vector<16x216xf32>, vector<216x512xf32>, vector<16x512xf32> -> vector<16x512xf32>
    %277 = vector.broadcast %194 : vector<16x1xf32> to vector<16x512xf32>
    %278 = arith.addf %276, %277 : vector<16x512xf32>
    %cst_64 = arith.constant dense<0.000000e+00> : vector<16xf32>
    %279 = vector.multi_reduction <add>, %278, %cst_64 [1] : vector<16x512xf32> to vector<16xf32>
    %280 = vector.shape_cast %279 : vector<16xf32> to vector<16x1xf32>
    %cst_65 = arith.constant 0.001953125 : f32
    %281 = vector.broadcast %cst_65 : f32 to vector<16x1xf32>
    %282 = arith.mulf %280, %281 : vector<16x1xf32>
    %283 = arith.mulf %278, %278 : vector<16x512xf32>
    %cst_66 = arith.constant dense<0.000000e+00> : vector<16xf32>
    %284 = vector.multi_reduction <add>, %283, %cst_66 [1] : vector<16x512xf32> to vector<16xf32>
    %285 = vector.shape_cast %284 : vector<16xf32> to vector<16x1xf32>
    %cst_67 = arith.constant 0.001953125 : f32
    %286 = vector.broadcast %cst_67 : f32 to vector<16x1xf32>
    %287 = arith.mulf %285, %286 : vector<16x1xf32>
    %288 = arith.mulf %282, %282 : vector<16x1xf32>
    %289 = arith.subf %287, %288 : vector<16x1xf32>
    %cst_68 = arith.constant 0.000000e+00 : f32
    %290 = vector.broadcast %cst_68 : f32 to vector<16x1xf32>
    %291 = arith.maximumf %289, %290 : vector<16x1xf32>
    %292 = vector.broadcast %282 : vector<16x1xf32> to vector<16x512xf32>
    %293 = arith.subf %278, %292 : vector<16x512xf32>
    %cst_69 = arith.constant 9.99999974E-6 : f32
    %294 = vector.broadcast %cst_69 : f32 to vector<16x1xf32>
    %295 = arith.addf %291, %294 : vector<16x1xf32>
    %296 = math.rsqrt %295 : vector<16x1xf32>
    %297 = vector.broadcast %296 : vector<16x1xf32> to vector<16x512xf32>
    %298 = arith.mulf %293, %297 : vector<16x512xf32>
    %cst_70 = arith.constant 0.000000e+00 : f32
    %299 = vector.broadcast %cst_70 : f32 to vector<16x512xf32>
    %300 = arith.maximumf %298, %299 : vector<16x512xf32>
    %c0_71 = arith.constant 0 : index
    %c0_72 = arith.constant 0 : index
    %301 = vector.load %arg5[%c0_71, %c0_72] : memref<16x432xf32, #tpu.memory_space<vmem>>, vector<16x432xf32>
    %c0_73 = arith.constant 0 : index
    %c0_74 = arith.constant 0 : index
    %302 = vector.load %arg6[%c0_73, %c0_74] : memref<16x1xf32, #tpu.memory_space<vmem>>, vector<16x1xf32>
    %c73_i32_75 = arith.constant 73 : i32
    %303 = tpu.dynamic_rotate %300 by %c73_i32_75 dim 1 : vector<16x512xf32>, i32 -> vector<16x512xf32>
    %304 = vector.broadcast %12 : vector<1x512xf32> to vector<16x512xf32>
    %305 = arith.mulf %303, %304 : vector<16x512xf32>
    %c72_i32_76 = arith.constant 72 : i32
    %306 = tpu.dynamic_rotate %300 by %c72_i32_76 dim 1 : vector<16x512xf32>, i32 -> vector<16x512xf32>
    %307 = vector.broadcast %19 : vector<1x512xf32> to vector<16x512xf32>
    %308 = arith.mulf %306, %307 : vector<16x512xf32>
    %c71_i32_77 = arith.constant 71 : i32
    %309 = tpu.dynamic_rotate %300 by %c71_i32_77 dim 1 : vector<16x512xf32>, i32 -> vector<16x512xf32>
    %310 = vector.broadcast %29 : vector<1x512xf32> to vector<16x512xf32>
    %311 = arith.mulf %309, %310 : vector<16x512xf32>
    %c65_i32_78 = arith.constant 65 : i32
    %312 = tpu.dynamic_rotate %300 by %c65_i32_78 dim 1 : vector<16x512xf32>, i32 -> vector<16x512xf32>
    %313 = vector.broadcast %36 : vector<1x512xf32> to vector<16x512xf32>
    %314 = arith.mulf %312, %313 : vector<16x512xf32>
    %c64_i32_79 = arith.constant 64 : i32
    %315 = tpu.dynamic_rotate %300 by %c64_i32_79 dim 1 : vector<16x512xf32>, i32 -> vector<16x512xf32>
    %316 = vector.broadcast %40 : vector<1x512xf32> to vector<16x512xf32>
    %317 = arith.mulf %315, %316 : vector<16x512xf32>
    %c63_i32_80 = arith.constant 63 : i32
    %318 = tpu.dynamic_rotate %300 by %c63_i32_80 dim 1 : vector<16x512xf32>, i32 -> vector<16x512xf32>
    %319 = vector.broadcast %47 : vector<1x512xf32> to vector<16x512xf32>
    %320 = arith.mulf %318, %319 : vector<16x512xf32>
    %c57_i32_81 = arith.constant 57 : i32
    %321 = tpu.dynamic_rotate %300 by %c57_i32_81 dim 1 : vector<16x512xf32>, i32 -> vector<16x512xf32>
    %322 = vector.broadcast %57 : vector<1x512xf32> to vector<16x512xf32>
    %323 = arith.mulf %321, %322 : vector<16x512xf32>
    %c56_i32_82 = arith.constant 56 : i32
    %324 = tpu.dynamic_rotate %300 by %c56_i32_82 dim 1 : vector<16x512xf32>, i32 -> vector<16x512xf32>
    %325 = vector.broadcast %64 : vector<1x512xf32> to vector<16x512xf32>
    %326 = arith.mulf %324, %325 : vector<16x512xf32>
    %c55_i32_83 = arith.constant 55 : i32
    %327 = tpu.dynamic_rotate %300 by %c55_i32_83 dim 1 : vector<16x512xf32>, i32 -> vector<16x512xf32>
    %328 = vector.broadcast %74 : vector<1x512xf32> to vector<16x512xf32>
    %329 = arith.mulf %327, %328 : vector<16x512xf32>
    %c9_i32_84 = arith.constant 9 : i32
    %330 = tpu.dynamic_rotate %300 by %c9_i32_84 dim 1 : vector<16x512xf32>, i32 -> vector<16x512xf32>
    %331 = vector.broadcast %81 : vector<1x512xf32> to vector<16x512xf32>
    %332 = arith.mulf %330, %331 : vector<16x512xf32>
    %c8_i32_85 = arith.constant 8 : i32
    %333 = tpu.dynamic_rotate %300 by %c8_i32_85 dim 1 : vector<16x512xf32>, i32 -> vector<16x512xf32>
    %334 = vector.broadcast %85 : vector<1x512xf32> to vector<16x512xf32>
    %335 = arith.mulf %333, %334 : vector<16x512xf32>
    %c7_i32_86 = arith.constant 7 : i32
    %336 = tpu.dynamic_rotate %300 by %c7_i32_86 dim 1 : vector<16x512xf32>, i32 -> vector<16x512xf32>
    %337 = vector.broadcast %92 : vector<1x512xf32> to vector<16x512xf32>
    %338 = arith.mulf %336, %337 : vector<16x512xf32>
    %c1_i32_87 = arith.constant 1 : i32
    %339 = tpu.dynamic_rotate %300 by %c1_i32_87 dim 1 : vector<16x512xf32>, i32 -> vector<16x512xf32>
    %340 = vector.broadcast %96 : vector<1x512xf32> to vector<16x512xf32>
    %341 = arith.mulf %339, %340 : vector<16x512xf32>
    %c511_i32_88 = arith.constant 511 : i32
    %342 = tpu.dynamic_rotate %300 by %c511_i32_88 dim 1 : vector<16x512xf32>, i32 -> vector<16x512xf32>
    %343 = vector.broadcast %100 : vector<1x512xf32> to vector<16x512xf32>
    %344 = arith.mulf %342, %343 : vector<16x512xf32>
    %c505_i32_89 = arith.constant 505 : i32
    %345 = tpu.dynamic_rotate %300 by %c505_i32_89 dim 1 : vector<16x512xf32>, i32 -> vector<16x512xf32>
    %346 = vector.broadcast %107 : vector<1x512xf32> to vector<16x512xf32>
    %347 = arith.mulf %345, %346 : vector<16x512xf32>
    %c504_i32_90 = arith.constant 504 : i32
    %348 = tpu.dynamic_rotate %300 by %c504_i32_90 dim 1 : vector<16x512xf32>, i32 -> vector<16x512xf32>
    %349 = vector.broadcast %111 : vector<1x512xf32> to vector<16x512xf32>
    %350 = arith.mulf %348, %349 : vector<16x512xf32>
    %c503_i32_91 = arith.constant 503 : i32
    %351 = tpu.dynamic_rotate %300 by %c503_i32_91 dim 1 : vector<16x512xf32>, i32 -> vector<16x512xf32>
    %352 = vector.broadcast %118 : vector<1x512xf32> to vector<16x512xf32>
    %353 = arith.mulf %351, %352 : vector<16x512xf32>
    %c457_i32_92 = arith.constant 457 : i32
    %354 = tpu.dynamic_rotate %300 by %c457_i32_92 dim 1 : vector<16x512xf32>, i32 -> vector<16x512xf32>
    %355 = vector.broadcast %128 : vector<1x512xf32> to vector<16x512xf32>
    %356 = arith.mulf %354, %355 : vector<16x512xf32>
    %c456_i32_93 = arith.constant 456 : i32
    %357 = tpu.dynamic_rotate %300 by %c456_i32_93 dim 1 : vector<16x512xf32>, i32 -> vector<16x512xf32>
    %358 = vector.broadcast %135 : vector<1x512xf32> to vector<16x512xf32>
    %359 = arith.mulf %357, %358 : vector<16x512xf32>
    %c455_i32_94 = arith.constant 455 : i32
    %360 = tpu.dynamic_rotate %300 by %c455_i32_94 dim 1 : vector<16x512xf32>, i32 -> vector<16x512xf32>
    %361 = vector.broadcast %145 : vector<1x512xf32> to vector<16x512xf32>
    %362 = arith.mulf %360, %361 : vector<16x512xf32>
    %c449_i32_95 = arith.constant 449 : i32
    %363 = tpu.dynamic_rotate %300 by %c449_i32_95 dim 1 : vector<16x512xf32>, i32 -> vector<16x512xf32>
    %364 = vector.broadcast %152 : vector<1x512xf32> to vector<16x512xf32>
    %365 = arith.mulf %363, %364 : vector<16x512xf32>
    %c448_i32_96 = arith.constant 448 : i32
    %366 = tpu.dynamic_rotate %300 by %c448_i32_96 dim 1 : vector<16x512xf32>, i32 -> vector<16x512xf32>
    %367 = vector.broadcast %156 : vector<1x512xf32> to vector<16x512xf32>
    %368 = arith.mulf %366, %367 : vector<16x512xf32>
    %c447_i32_97 = arith.constant 447 : i32
    %369 = tpu.dynamic_rotate %300 by %c447_i32_97 dim 1 : vector<16x512xf32>, i32 -> vector<16x512xf32>
    %370 = vector.broadcast %163 : vector<1x512xf32> to vector<16x512xf32>
    %371 = arith.mulf %369, %370 : vector<16x512xf32>
    %c441_i32_98 = arith.constant 441 : i32
    %372 = tpu.dynamic_rotate %300 by %c441_i32_98 dim 1 : vector<16x512xf32>, i32 -> vector<16x512xf32>
    %373 = vector.broadcast %173 : vector<1x512xf32> to vector<16x512xf32>
    %374 = arith.mulf %372, %373 : vector<16x512xf32>
    %c440_i32_99 = arith.constant 440 : i32
    %375 = tpu.dynamic_rotate %300 by %c440_i32_99 dim 1 : vector<16x512xf32>, i32 -> vector<16x512xf32>
    %376 = vector.broadcast %180 : vector<1x512xf32> to vector<16x512xf32>
    %377 = arith.mulf %375, %376 : vector<16x512xf32>
    %c439_i32_100 = arith.constant 439 : i32
    %378 = tpu.dynamic_rotate %300 by %c439_i32_100 dim 1 : vector<16x512xf32>, i32 -> vector<16x512xf32>
    %379 = vector.broadcast %190 : vector<1x512xf32> to vector<16x512xf32>
    %380 = arith.mulf %378, %379 : vector<16x512xf32>
    %381 = tpu.concatenate %305, %308, %311, %314, %317, %320, %323, %326, %329, %332, %335, %338, %341, %300, %344, %347 in 0 : vector<16x512xf32>, vector<16x512xf32>, vector<16x512xf32>, vector<16x512xf32>, vector<16x512xf32>, vector<16x512xf32>, vector<16x512xf32>, vector<16x512xf32>, vector<16x512xf32>, vector<16x512xf32>, vector<16x512xf32>, vector<16x512xf32>, vector<16x512xf32>, vector<16x512xf32>, vector<16x512xf32>, vector<16x512xf32> -> vector<256x512xf32>
    %382 = tpu.concatenate %350, %353, %356, %359, %362, %365, %368, %371, %374, %377, %380 in 0 : vector<16x512xf32>, vector<16x512xf32>, vector<16x512xf32>, vector<16x512xf32>, vector<16x512xf32>, vector<16x512xf32>, vector<16x512xf32>, vector<16x512xf32>, vector<16x512xf32>, vector<16x512xf32>, vector<16x512xf32> -> vector<176x512xf32>
    %383 = tpu.concatenate %381, %382 in 0 : vector<256x512xf32>, vector<176x512xf32> -> vector<432x512xf32>
    %cst_101 = arith.constant dense<0.000000e+00> : vector<16x512xf32>
    %384 = tpu.matmul %301, %383, %cst_101 {dimension_numbers = #tpu.dot_dimension_numbers<[1], [0], [0], [1], [0, 0, 1, 1], [], []>} : vector<16x432xf32>, vector<432x512xf32>, vector<16x512xf32> -> vector<16x512xf32>
    %385 = vector.broadcast %302 : vector<16x1xf32> to vector<16x512xf32>
    %386 = arith.addf %384, %385 : vector<16x512xf32>
    %cst_102 = arith.constant dense<0.000000e+00> : vector<16xf32>
    %387 = vector.multi_reduction <add>, %386, %cst_102 [1] : vector<16x512xf32> to vector<16xf32>
    %388 = vector.shape_cast %387 : vector<16xf32> to vector<16x1xf32>
    %cst_103 = arith.constant 0.001953125 : f32
    %389 = vector.broadcast %cst_103 : f32 to vector<16x1xf32>
    %390 = arith.mulf %388, %389 : vector<16x1xf32>
    %391 = arith.mulf %386, %386 : vector<16x512xf32>
    %cst_104 = arith.constant dense<0.000000e+00> : vector<16xf32>
    %392 = vector.multi_reduction <add>, %391, %cst_104 [1] : vector<16x512xf32> to vector<16xf32>
    %393 = vector.shape_cast %392 : vector<16xf32> to vector<16x1xf32>
    %cst_105 = arith.constant 0.001953125 : f32
    %394 = vector.broadcast %cst_105 : f32 to vector<16x1xf32>
    %395 = arith.mulf %393, %394 : vector<16x1xf32>
    %396 = arith.mulf %390, %390 : vector<16x1xf32>
    %397 = arith.subf %395, %396 : vector<16x1xf32>
    %cst_106 = arith.constant 0.000000e+00 : f32
    %398 = vector.broadcast %cst_106 : f32 to vector<16x1xf32>
    %399 = arith.maximumf %397, %398 : vector<16x1xf32>
    %400 = vector.broadcast %390 : vector<16x1xf32> to vector<16x512xf32>
    %401 = arith.subf %386, %400 : vector<16x512xf32>
    %cst_107 = arith.constant 9.99999974E-6 : f32
    %402 = vector.broadcast %cst_107 : f32 to vector<16x1xf32>
    %403 = arith.addf %399, %402 : vector<16x1xf32>
    %404 = math.rsqrt %403 : vector<16x1xf32>
    %405 = vector.broadcast %404 : vector<16x1xf32> to vector<16x512xf32>
    %406 = arith.mulf %401, %405 : vector<16x512xf32>
    %cst_108 = arith.constant 0.000000e+00 : f32
    %407 = vector.broadcast %cst_108 : f32 to vector<16x512xf32>
    %408 = arith.maximumf %406, %407 : vector<16x512xf32>
    %c0_109 = arith.constant 0 : index
    %c0_110 = arith.constant 0 : index
    %c0_111 = arith.constant 0 : index
    %409 = vector.load %arg7[%c0_109, %c0_110, %c0_111] : memref<1x16x512xf32, #tpu.memory_space<vmem>>, vector<1x16x512xf32>
    %410 = vector.shape_cast %409 : vector<1x16x512xf32> to vector<16x512xf32>
    %411 = vector.shape_cast %408 : vector<16x512xf32> to vector<1x16x512xf32>
    tpu.vector_store %arg7[%c0_109, %c0_110, %c0_111], %411 {strides = array<i32>} : memref<1x16x512xf32, #tpu.memory_space<vmem>>, vector<1x16x512xf32>,
    return
  }
  func.func @transform_0(%arg0: i32) -> (i32, i32) {
    %c0_i32 = arith.constant 0 : i32
    %c0_i32_0 = arith.constant 0 : i32
    %c0_i32_1 = arith.constant 0 : i32
    return %c0_i32, %c0_i32_0 : i32, i32
  }
  func.func @transform_1(%arg0: i32) -> (i32, i32, i32) {
    %c0_i32 = arith.constant 0 : i32
    %c0_i32_0 = arith.constant 0 : i32
    %c0_i32_1 = arith.constant 0 : i32
    return %arg0, %c0_i32, %c0_i32_0 : i32, i32, i32
  }
  func.func @transform_2(%arg0: i32) -> (i32, i32) {
    %c0_i32 = arith.constant 0 : i32
    %c0_i32_0 = arith.constant 0 : i32
    %c0_i32_1 = arith.constant 0 : i32
    return %c0_i32, %c0_i32_0 : i32, i32
  }
  func.func @transform_3(%arg0: i32) -> (i32, i32) {
    %c0_i32 = arith.constant 0 : i32
    %c0_i32_0 = arith.constant 0 : i32
    %c0_i32_1 = arith.constant 0 : i32
    return %c0_i32, %c0_i32_0 : i32, i32
  }
  func.func @transform_4(%arg0: i32) -> (i32, i32) {
    %c0_i32 = arith.constant 0 : i32
    %c0_i32_0 = arith.constant 0 : i32
    %c0_i32_1 = arith.constant 0 : i32
    return %c0_i32, %c0_i32_0 : i32, i32
  }
  func.func @transform_5(%arg0: i32) -> (i32, i32) {
    %c0_i32 = arith.constant 0 : i32
    %c0_i32_0 = arith.constant 0 : i32
    %c0_i32_1 = arith.constant 0 : i32
    return %c0_i32, %c0_i32_0 : i32, i32
  }
  func.func @transform_6(%arg0: i32) -> (i32, i32, i32) {
    %c0_i32 = arith.constant 0 : i32
    %c0_i32_0 = arith.constant 0 : i32
    %c0_i32_1 = arith.constant 0 : i32
    return %arg0, %c0_i32, %c0_i32_0 : i32, i32, i32
  }
}

</mosaic_0001>

<llo_original>
// kernel: double_conv.1
$region0: #{double_conv.1}
  #allocation0 [shape = 'u32[]', space=smem, size = 0x4, offset = 0x4, fixed_abs, tag = 'smem constant byte address 0x4 - core index']
  #allocation1 [shape = 'u32[144,128]{1,0:T(1,128)}', space=vmem, size = 0x12000, scoped, tag = 'internal scratch']
  %s0 = inlined_call_operand.vmem [shape: s32[3,512], index: 0, kind: input, shape index: {}]
  %s1 = inlined_call_operand.vmem [shape: f32[2,8,512], index: 1, kind: input, shape index: {}]
  %s2 = inlined_call_operand.vmem [shape: f32[16,216], index: 2, kind: input, shape index: {}]
  %s3 = inlined_call_operand.vmem [shape: f32[16,1], index: 3, kind: input, shape index: {}]
  %s4 = inlined_call_operand.vmem [shape: f32[16,432], index: 4, kind: input, shape index: {}]
  %s5 = inlined_call_operand.vmem [shape: f32[16,1], index: 5, kind: input, shape index: {}]
  %s6 = inlined_call_operand.vmem [shape: f32[2,16,512], index: 6, kind: output, shape index: {}]
  %s7 = sld [smem:[#allocation0]]
  $region57: #{double_conv.1} parent=0
    _
  %s9 = ssub.s32 1, %s7
  %s10 = scalar_select 0, %s9, %s7
  loop: start=0, step=1, limit=4
  $region2: #{double_conv.1} parent=0 // loop_pre_header
    _
  $region3: #{double_conv.1} parent=0 // loop_header
    %s12 = sphi 0, %s16
    %p13 = scmp.ge.s32.totalorder %s12, 4
    %s20 = sphi 0, %s20
    %s22 = sphi 0, %s20
    %s23 = sphi 0, %s22
    %s37 = sphi 0, %s23
    %s43 = sphi 0, %s45
    %s46 = sphi 0, %s43
    %s47 = sphi 0, %s46
    %s63 = sphi 0, %s47
    %s67 = sphi 0, %s67
    %s69 = sphi 0, %s67
    %s70 = sphi 0, %s69
    %s84 = sphi 0, %s70
    %s88 = sphi 0, %s88
    %s90 = sphi 0, %s88
    %s91 = sphi 0, %s90
    %s105 = sphi 0, %s91
    %s109 = sphi 0, %s109
    %s111 = sphi 0, %s109
    %s112 = sphi 0, %s111
    %s126 = sphi 0, %s112
    %s130 = sphi 0, %s130
    %s132 = sphi 0, %s130
    %s133 = sphi 0, %s132
    %s147 = sphi 0, %s133
    %s153 = sphi 0, %s155
    %s156 = sphi 0, %s153
    %s157 = sphi 0, %s156
    %s173 = sphi 0, %s157
  $region4: #{double_conv.1} parent=0 // loop_header_branch
    %15 = sbr.rel (%p13) target = $region8
  $region5: #{double_conv.1} parent=0 // loop_body
    %s17 = ssub.s32 %s12, 1
    %s18 = ssub.s32 %s12, 2
    %s19 = sadd.s32 %s12, 1
    %s21 = sadd.s32 %s20, 1
    %p24 = scmp.eq.s32.totalorder %s12, 1
    %p25 = scmp.ne.s32.totalorder %s20, %s22
    %p26 = scmp.eq.s32.totalorder %s12, 0
    %p27 = por %p25, %p26
    %p28 = scmp.ne.s32.totalorder %s20, %s22
    %p29 = scmp.eq.s32.totalorder %s17, 1
    %p30 = por %p28, %p29
    %p31 = scmp.ne.s32.totalorder %s22, %s23
    %p32 = scmp.eq.s32.totalorder %s17, 0
    %p33 = por %p31, %p32
    %p34 = scmp.ne.s32.totalorder %s22, %s23
    %p35 = scmp.eq.s32.totalorder %s18, 1
    %p36 = por %p34, %p35
    %p38 = scmp.ne.s32.totalorder %s23, %s37
    %p39 = scmp.eq.s32.totalorder %s18, 0
    %p40 = por %p38, %p39
    %s41 = ssub.s32 %s12, %s19
    %p42 = scmp.eq.s32.totalorder %s41, 0
    %s44 = sadd.s32 %s43, 1
    %s45 = scalar_select %p42, %s43, %s44
    %p48 = pneg %p42
    %p49 = scmp.eq.s32.totalorder %s12, 1
    %p50 = por %p48, %p49
    %p51 = scmp.ne.s32.totalorder %s43, %s46
    %p52 = scmp.eq.s32.totalorder %s12, 0
    %p53 = por %p51, %p52
    %p54 = scmp.ne.s32.totalorder %s43, %s46
    %p55 = scmp.eq.s32.totalorder %s17, 1
    %p56 = por %p54, %p55
    %p57 = scmp.ne.s32.totalorder %s46, %s47
    %p58 = scmp.eq.s32.totalorder %s17, 0
    %p59 = por %p57, %p58
    %p60 = scmp.ne.s32.totalorder %s46, %s47
    %p61 = scmp.eq.s32.totalorder %s18, 1
    %p62 = por %p60, %p61
    %p64 = scmp.ne.s32.totalorder %s47, %s63
    %p65 = scmp.eq.s32.totalorder %s18, 0
    %p66 = por %p64, %p65
    %s68 = sadd.s32 %s67, 1
    %p71 = scmp.eq.s32.totalorder %s12, 1
    %p72 = scmp.ne.s32.totalorder %s67, %s69
    %p73 = scmp.eq.s32.totalorder %s12, 0
    %p74 = por %p72, %p73
    %p75 = scmp.ne.s32.totalorder %s67, %s69
    %p76 = scmp.eq.s32.totalorder %s17, 1
    %p77 = por %p75, %p76
    %p78 = scmp.ne.s32.totalorder %s69, %s70
    %p79 = scmp.eq.s32.totalorder %s17, 0
    %p80 = por %p78, %p79
    %p81 = scmp.ne.s32.totalorder %s69, %s70
    %p82 = scmp.eq.s32.totalorder %s18, 1
    %p83 = por %p81, %p82
    %p85 = scmp.ne.s32.totalorder %s70, %s84
    %p86 = scmp.eq.s32.totalorder %s18, 0
    %p87 = por %p85, %p86
    %s89 = sadd.s32 %s88, 1
    %p92 = scmp.eq.s32.totalorder %s12, 1
    %p93 = scmp.ne.s32.totalorder %s88, %s90
    %p94 = scmp.eq.s32.totalorder %s12, 0
    %p95 = por %p93, %p94
    %p96 = scmp.ne.s32.totalorder %s88, %s90
    %p97 = scmp.eq.s32.totalorder %s17, 1
    %p98 = por %p96, %p97
    %p99 = scmp.ne.s32.totalorder %s90, %s91
    %p100 = scmp.eq.s32.totalorder %s17, 0
    %p101 = por %p99, %p100
    %p102 = scmp.ne.s32.totalorder %s90, %s91
    %p103 = scmp.eq.s32.totalorder %s18, 1
    %p104 = por %p102, %p103
    %p106 = scmp.ne.s32.totalorder %s91, %s105
    %p107 = scmp.eq.s32.totalorder %s18, 0
    %p108 = por %p106, %p107
    %s110 = sadd.s32 %s109, 1
    %p113 = scmp.eq.s32.totalorder %s12, 1
    %p114 = scmp.ne.s32.totalorder %s109, %s111
    %p115 = scmp.eq.s32.totalorder %s12, 0
    %p116 = por %p114, %p115
    %p117 = scmp.ne.s32.totalorder %s109, %s111
    %p118 = scmp.eq.s32.totalorder %s17, 1
    %p119 = por %p117, %p118
    %p120 = scmp.ne.s32.totalorder %s111, %s112
    %p121 = scmp.eq.s32.totalorder %s17, 0
    %p122 = por %p120, %p121
    %p123 = scmp.ne.s32.totalorder %s111, %s112
    %p124 = scmp.eq.s32.totalorder %s18, 1
    %p125 = por %p123, %p124
    %p127 = scmp.ne.s32.totalorder %s112, %s126
    %p128 = scmp.eq.s32.totalorder %s18, 0
    %p129 = por %p127, %p128
    %s131 = sadd.s32 %s130, 1
    %p134 = scmp.eq.s32.totalorder %s12, 1
    %p135 = scmp.ne.s32.totalorder %s130, %s132
    %p136 = scmp.eq.s32.totalorder %s12, 0
    %p137 = por %p135, %p136
    %p138 = scmp.ne.s32.totalorder %s130, %s132
    %p139 = scmp.eq.s32.totalorder %s17, 1
    %p140 = por %p138, %p139
    %p141 = scmp.ne.s32.totalorder %s132, %s133
    %p142 = scmp.eq.s32.totalorder %s17, 0
    %p143 = por %p141, %p142
    %p144 = scmp.ne.s32.totalorder %s132, %s133
    %p145 = scmp.eq.s32.totalorder %s18, 1
    %p146 = por %p144, %p145
    %p148 = scmp.ne.s32.totalorder %s133, %s147
    %p149 = scmp.eq.s32.totalorder %s18, 0
    %p150 = por %p148, %p149
    %s151 = ssub.s32 %s12, %s19
    %p152 = scmp.eq.s32.totalorder %s151, 0
    %s154 = sadd.s32 %s153, 1
    %s155 = scalar_select %p152, %s153, %s154
    %p158 = pneg %p152
    %p159 = scmp.eq.s32.totalorder %s12, 1
    %p160 = por %p158, %p159
    %p161 = scmp.ne.s32.totalorder %s153, %s156
    %p162 = scmp.eq.s32.totalorder %s12, 0
    %p163 = por %p161, %p162
    %p164 = scmp.ne.s32.totalorder %s153, %s156
    %p165 = scmp.eq.s32.totalorder %s17, 1
    %p166 = por %p164, %p165
    %p167 = scmp.ne.s32.totalorder %s156, %s157
    %p168 = scmp.eq.s32.totalorder %s17, 0
    %p169 = por %p167, %p168
    %p170 = scmp.ne.s32.totalorder %s156, %s157
    %p171 = scmp.eq.s32.totalorder %s18, 1
    %p172 = por %p170, %p171
    %p174 = scmp.ne.s32.totalorder %s157, %s173
    %p175 = scmp.eq.s32.totalorder %s18, 0
    %p176 = por %p174, %p175
    %p177 = scmp.le.s32.totalorder 1, %s12
    %p178 = scmp.lt.s32.totalorder %s12, 3
    %p179 = pnand %p177, %p178
    %p180 = pneg %p179
    // Predicated region
    $region9: #{double_conv.1} parent=5 // pred_check
      _
    $region10: #{double_conv.1} parent=5 // pred_check_branch
      %182 = sbr.rel (%p179) target = $region12
    $region11: #{double_conv.1} parent=5 // pred_region
      %s183 = ssub.s32 %s12, 1
      // Predicated region
      $region13: #{double_conv.1} parent=11 // pred_check
        %p184 = pneg %p33
      $region14: #{double_conv.1} parent=11 // pred_check_branch
        %186 = sbr.rel (%p184) target = $region16
      $region15: #{double_conv.1} parent=11 // pred_region
        _
      $region16: #{double_conv.1} parent=11 // pred_fallthru
        _
      // Predicated region
      $region17: #{double_conv.1} parent=11 // pred_check
        %p187 = pneg %p80
      $region18: #{double_conv.1} parent=11 // pred_check_branch
        %189 = sbr.rel (%p187) target = $region20
      $region19: #{double_conv.1} parent=11 // pred_region
        _
      $region20: #{double_conv.1} parent=11 // pred_fallthru
        _
      // Predicated region
      $region21: #{double_conv.1} parent=11 // pred_check
        %p190 = pneg %p101
      $region22: #{double_conv.1} parent=11 // pred_check_branch
        %192 = sbr.rel (%p190) target = $region24
      $region23: #{double_conv.1} parent=11 // pred_region
        _
      $region24: #{double_conv.1} parent=11 // pred_fallthru
        _
      // Predicated region
      $region25: #{double_conv.1} parent=11 // pred_check
        %p193 = pneg %p122
      $region26: #{double_conv.1} parent=11 // pred_check_branch
        %195 = sbr.rel (%p193) target = $region28
      $region27: #{double_conv.1} parent=11 // pred_region
        _
      $region28: #{double_conv.1} parent=11 // pred_fallthru
        _
      // Predicated region
      $region29: #{double_conv.1} parent=11 // pred_check
        %p196 = pneg %p143
      $region30: #{double_conv.1} parent=11 // pred_check_branch
        %198 = sbr.rel (%p196) target = $region32
      $region31: #{double_conv.1} parent=11 // pred_region
        _
      $region32: #{double_conv.1} parent=11 // pred_fallthru
        _
    $region12: #{double_conv.1} parent=5 // pred_fallthru
      _
    %p199 = scmp.lt.s32.totalorder %s12, 2
    // Predicated region
    $region33: #{double_conv.1} parent=5 // pred_check
      %p200 = pneg %p199
    $region34: #{double_conv.1} parent=5 // pred_check_branch
      %202 = sbr.rel (%p200) target = $region36
    $region35: #{double_conv.1} parent=5 // pred_region
      // Predicated region
      $region37: #{double_conv.1} parent=35 // pred_check
        %p203 = pneg %p53
      $region38: #{double_conv.1} parent=35 // pred_check_branch
        %205 = sbr.rel (%p203) target = $region40
      $region39: #{double_conv.1} parent=35 // pred_region
        %p206 = scmp.lt.s32.totalorder %s12, 1
        %s207 = scalar_select %p206, %s12, 1
        %s208 = smul.addr %s207, 4
        %s209 = smul.addr %s208, 8
        %s210 = scalar_lea.vmem %s1, %s209
      $region40: #{double_conv.1} parent=35 // pred_fallthru
        _
    $region36: #{double_conv.1} parent=5 // pred_fallthru
      _
    %p211 = scmp.le.s32.totalorder 1, %s12
    %p212 = scmp.lt.s32.totalorder %s12, 3
    %p213 = pnand %p211, %p212
    %p214 = pneg %p213
    // Predicated region
    $region41: #{double_conv.1} parent=5 // pred_check
      _
    $region42: #{double_conv.1} parent=5 // pred_check_branch
      %216 = sbr.rel (%p213) target = $region44
    $region43: #{double_conv.1} parent=5 // pred_region
      %s217 = ssub.s32 %s12, 1
      %p218 = pneg %p33
      %p219 = pneg %p30
      %p220 = scmp.lt.s32.totalorder %s17, 1
      %s221 = scalar_select %p220, %s17, 1
      %s222 = smul.addr %s221, 4
      %s223 = smul.addr %s222, 8
      %s224 = scalar_lea.vmem %s1, %s223
      %p225 = pneg %p59
      %p226 = pneg %p56
      %p227 = pneg %p80
      %p228 = pneg %p77
      %p229 = pneg %p101
      %p230 = pneg %p98
      %p231 = pneg %p122
      %p232 = pneg %p119
      %p233 = pneg %p143
      %p234 = pneg %p140
      %p235 = pneg %p169
      %p236 = pneg %p166
      %p237 = scmp.lt.s32.totalorder %s17, 1
      %s238 = scalar_select %p237, %s17, 1
      %s239 = smul.addr %s238, 8
      %s240 = smul.addr %s239, 8
      %s241 = scalar_lea.vmem %s6, %s240
      %p242 = scmp.lt.s32.totalorder %s17, 1
      %s243 = scalar_select %p242, %s17, 1
      %s244 = smul.addr %s243, 4
      %s245 = smul.addr %s244, 8
      %s246 = scalar_lea.vmem %s1, %s245
      %p247 = scmp.lt.s32.totalorder %s17, 1
      %s248 = scalar_select %p247, %s17, 1
      %s249 = smul.addr %s248, 8
      %s250 = smul.addr %s249, 8
      %s251 = scalar_lea.vmem %s6, %s250
      %v252 = vld [vmem:[%s0] ss:$4 sm:$0xf]
      %s253 = scalar_lea.vmem %s0, 1
      %v254 = vld [vmem:[%s253] ss:$4 sm:$0xf]
      %s255 = scalar_lea.vmem %s0, 2
      %v256 = vld [vmem:[%s255] ss:$4 sm:$0xf]
      %vm257 = vcmp.ge.s32.totalorder %v252, 1
      %vm258 = vcmp.ge.s32.totalorder %v254, 1
      %vm259 = vcmp.ge.s32.totalorder %v256, 1
      %vm260 = vmand %vm257, %vm258
      %vm261 = vmand %vm260, %vm259
      %v262 = vsel %vm261, 1, 0
      %v263 = vcvt.s32.f32 %v262
      %v264 = vsel %vm260, 1, 0
      %v265 = vcvt.s32.f32 %v264
      %vm266 = vcmp.lt.s32.totalorder %v256, 7
      %vm267 = vmand %vm260, %vm266
      %v268 = vsel %vm267, 1, 0
      %v269 = vcvt.s32.f32 %v268
      %vm270 = vmand %vm257, %vm259
      %v271 = vsel %vm270, 1, 0
      %v272 = vcvt.s32.f32 %v271
      %v273 = vsel %vm257, 1, 0
      %v274 = vcvt.s32.f32 %v273
      %vm275 = vmand %vm257, %vm266
      %v276 = vsel %vm275, 1, 0
      %v277 = vcvt.s32.f32 %v276
      %vm278 = vcmp.lt.s32.totalorder %v254, 7
      %vm279 = vmand %vm257, %vm278
      %vm280 = vmand %vm279, %vm259
      %v281 = vsel %vm280, 1, 0
      %v282 = vcvt.s32.f32 %v281
      %v283 = vsel %vm279, 1, 0
      %v284 = vcvt.s32.f32 %v283
      %vm285 = vmand %vm279, %vm266
      %v286 = vsel %vm285, 1, 0
      %v287 = vcvt.s32.f32 %v286
      %vm288 = vmand %vm258, %vm259
      %v289 = vsel %vm288, 1, 0
      %v290 = vcvt.s32.f32 %v289
      %v291 = vsel %vm258, 1, 0
      %v292 = vcvt.s32.f32 %v291
      %vm293 = vmand %vm258, %vm266
      %v294 = vsel %vm293, 1, 0
      %v295 = vcvt.s32.f32 %v294
      %v296 = vsel %vm259, 1, 0
      %v297 = vcvt.s32.f32 %v296
      %v298 = vsel %vm266, 1, 0
      %v299 = vcvt.s32.f32 %v298
      %vm300 = vmand %vm278, %vm259
      %v301 = vsel %vm300, 1, 0
      %v302 = vcvt.s32.f32 %v301
      %v303 = vsel %vm278, 1, 0
      %v304 = vcvt.s32.f32 %v303
      %vm305 = vmand %vm278, %vm266
      %v306 = vsel %vm305, 1, 0
      %v307 = vcvt.s32.f32 %v306
      %vm308 = vcmp.lt.s32.totalorder %v252, 7
      %vm309 = vmand %vm308, %vm258
      %vm310 = vmand %vm309, %vm259
      %v311 = vsel %vm310, 1, 0
      %v312 = vcvt.s32.f32 %v311
      %v313 = vsel %vm309, 1, 0
      %v314 = vcvt.s32.f32 %v313
      %vm315 = vmand %vm309, %vm266
      %v316 = vsel %vm315, 1, 0
      %v317 = vcvt.s32.f32 %v316
      %vm318 = vmand %vm308, %vm259
      %v319 = vsel %vm318, 1, 0
      %v320 = vcvt.s32.f32 %v319
      %v321 = vsel %vm308, 1, 0
      %v322 = vcvt.s32.f32 %v321
      %vm323 = vmand %vm308, %vm266
      %v324 = vsel %vm323, 1, 0
      %v325 = vcvt.s32.f32 %v324
      %vm326 = vmand %vm308, %vm278
      %vm327 = vmand %vm326, %vm259
      %v328 = vsel %vm327, 1, 0
      %v329 = vcvt.s32.f32 %v328
      %v330 = vsel %vm326, 1, 0
      %v331 = vcvt.s32.f32 %v330
      %vm332 = vmand %vm326, %vm266
      %v333 = vsel %vm332, 1, 0
      %v334 = vcvt.s32.f32 %v333
      %v335 = vld [vmem:[%s246] sm:$0xff]
      %v336 = vld [vmem:[%s246 + $0x8] sm:$0xff]
      %v337 = vld [vmem:[%s246 + $0x10] sm:$0xff]
      %v338 = vld [vmem:[%s246 + $0x18] sm:$0xff]
      %v339 = vld [vmem:[%s2] sm:$0xff]
      %v340 = vld [vmem:[%s2 + $0x8] sm:$0xff]
      %v341 = vld [vmem:[%s2 + $0x10] sm:$0xff]
      %v342 = vld [vmem:[%s2 + $0x18] sm:$0xff]
      %v343 = vld [vmem:[%s3] sm:$0xff]
      %v344 = vld [vmem:[%s3 + $0x8] sm:$0xff]
      %345 = vrot.lane.b32.xlu0 %v335, 73
      %v346 = vpop.permute.xlu0 %345
      %347 = vrot.lane.b32.xlu0 %v336, 73
      %v348 = vpop.permute.xlu0 %347
      %349 = vrot.lane.b32.xlu0 %v337, 73
      %v350 = vpop.permute.xlu0 %349
      %351 = vrot.lane.b32.xlu0 %v338, 73
      %v352 = vpop.permute.xlu0 %351
      %v353 = vlaneseq
      %v354 = vand.u32 %v353, 127
      %vm355 = vcmp.lt.s32.totalorder %v354, 73
      %v356 = vsel %vm355, %v350, %v352
      %v357 = vsel %vm355, %v348, %v350
      %v358 = vsel %vm355, %v346, %v348
      %v359 = vsel %vm355, %v352, %v346
      %v361 = vlaneseq
      %v362 = vshrl.u32 %v361, 7
      %v363 = vsub.s32 0, %v362
      %v364 = vrot.slane %v263, %v363
      %v365 = vlaneseq
      %v366 = vshrl.u32 %v365, 7
      %v367 = vsub.s32 1, %v366
      %v368 = vrot.slane %v263, %v367
      %v369 = vlaneseq
      %v370 = vshrl.u32 %v369, 7
      %v371 = vsub.s32 2, %v370
      %v372 = vrot.slane %v263, %v371
      %v373 = vlaneseq
      %v374 = vshrl.u32 %v373, 7
      %v375 = vsub.s32 3, %v374
      %v376 = vrot.slane %v263, %v375
      %v381 = vmul.f32 %v359, %v364
      %v382 = vmul.f32 %v358, %v368
      %v383 = vmul.f32 %v357, %v372
      %v384 = vmul.f32 %v356, %v376
      %385 = vrot.lane.b32.xlu0 %v335, 72
      %v386 = vpop.permute.xlu0 %385
      %387 = vrot.lane.b32.xlu0 %v336, 72
      %v388 = vpop.permute.xlu0 %387
      %389 = vrot.lane.b32.xlu0 %v337, 72
      %v390 = vpop.permute.xlu0 %389
      %391 = vrot.lane.b32.xlu0 %v338, 72
      %v392 = vpop.permute.xlu0 %391
      %vm393 = vcmp.lt.s32.totalorder %v354, 72
      %v394 = vsel %vm393, %v390, %v392
      %v395 = vsel %vm393, %v388, %v390
      %v396 = vsel %vm393, %v386, %v388
      %v397 = vsel %vm393, %v392, %v386
      %v399 = vlaneseq
      %v400 = vshrl.u32 %v399, 7
      %v401 = vsub.s32 0, %v400
      %v402 = vrot.slane %v265, %v401
      %v403 = vlaneseq
      %v404 = vshrl.u32 %v403, 7
      %v405 = vsub.s32 1, %v404
      %v406 = vrot.slane %v265, %v405
      %v407 = vlaneseq
      %v408 = vshrl.u32 %v407, 7
      %v409 = vsub.s32 2, %v408
      %v410 = vrot.slane %v265, %v409
      %v411 = vlaneseq
      %v412 = vshrl.u32 %v411, 7
      %v413 = vsub.s32 3, %v412
      %v414 = vrot.slane %v265, %v413
      %v419 = vmul.f32 %v397, %v402
      %v420 = vmul.f32 %v396, %v406
      %v421 = vmul.f32 %v395, %v410
      %v422 = vmul.f32 %v394, %v414
      %423 = vrot.lane.b32.xlu0 %v335, 71
      %v424 = vpop.permute.xlu0 %423
      %425 = vrot.lane.b32.xlu0 %v336, 71
      %v426 = vpop.permute.xlu0 %425
      %427 = vrot.lane.b32.xlu0 %v337, 71
      %v428 = vpop.permute.xlu0 %427
      %429 = vrot.lane.b32.xlu0 %v338, 71
      %v430 = vpop.permute.xlu0 %429
      %vm431 = vcmp.lt.s32.totalorder %v354, 71
      %v432 = vsel %vm431, %v428, %v430
      %v433 = vsel %vm431, %v426, %v428
      %v434 = vsel %vm431, %v424, %v426
      %v435 = vsel %vm431, %v430, %v424
      %v437 = vlaneseq
      %v438 = vshrl.u32 %v437, 7
      %v439 = vsub.s32 0, %v438
      %v440 = vrot.slane %v269, %v439
      %v441 = vlaneseq
      %v442 = vshrl.u32 %v441, 7
      %v443 = vsub.s32 1, %v442
      %v444 = vrot.slane %v269, %v443
      %v445 = vlaneseq
      %v446 = vshrl.u32 %v445, 7
      %v447 = vsub.s32 2, %v446
      %v448 = vrot.slane %v269, %v447
      %v449 = vlaneseq
      %v450 = vshrl.u32 %v449, 7
      %v451 = vsub.s32 3, %v450
      %v452 = vrot.slane %v269, %v451
      %v457 = vmul.f32 %v435, %v440
      %v458 = vmul.f32 %v434, %v444
      %v459 = vmul.f32 %v433, %v448
      %v460 = vmul.f32 %v432, %v452
      %461 = vrot.lane.b32.xlu0 %v335, 65
      %v462 = vpop.permute.xlu0 %461
      %463 = vrot.lane.b32.xlu0 %v336, 65
      %v464 = vpop.permute.xlu0 %463
      %465 = vrot.lane.b32.xlu0 %v337, 65
      %v466 = vpop.permute.xlu0 %465
      %467 = vrot.lane.b32.xlu0 %v338, 65
      %v468 = vpop.permute.xlu0 %467
      %vm469 = vcmp.lt.s32.totalorder %v354, 65
      %v470 = vsel %vm469, %v466, %v468
      %v471 = vsel %vm469, %v464, %v466
      %v472 = vsel %vm469, %v462, %v464
      %v473 = vsel %vm469, %v468, %v462
      %v475 = vlaneseq
      %v476 = vshrl.u32 %v475, 7
      %v477 = vsub.s32 0, %v476
      %v478 = vrot.slane %v272, %v477
      %v479 = vlaneseq
      %v480 = vshrl.u32 %v479, 7
      %v481 = vsub.s32 1, %v480
      %v482 = vrot.slane %v272, %v481
      %v483 = vlaneseq
      %v484 = vshrl.u32 %v483, 7
      %v485 = vsub.s32 2, %v484
      %v486 = vrot.slane %v272, %v485
      %v487 = vlaneseq
      %v488 = vshrl.u32 %v487, 7
      %v489 = vsub.s32 3, %v488
      %v490 = vrot.slane %v272, %v489
      %v495 = vmul.f32 %v473, %v478
      %v496 = vmul.f32 %v472, %v482
      %v497 = vmul.f32 %v471, %v486
      %v498 = vmul.f32 %v470, %v490
      %499 = vrot.lane.b32.xlu0 %v335, 64
      %v500 = vpop.permute.xlu0 %499
      %501 = vrot.lane.b32.xlu0 %v336, 64
      %v502 = vpop.permute.xlu0 %501
      %503 = vrot.lane.b32.xlu0 %v337, 64
      %v504 = vpop.permute.xlu0 %503
      %505 = vrot.lane.b32.xlu0 %v338, 64
      %v506 = vpop.permute.xlu0 %505
      %vm507 = vcmp.lt.s32.totalorder %v354, 64
      %v508 = vsel %vm507, %v504, %v506
      %v509 = vsel %vm507, %v502, %v504
      %v510 = vsel %vm507, %v500, %v502
      %v511 = vsel %vm507, %v506, %v500
      %v513 = vlaneseq
      %v514 = vshrl.u32 %v513, 7
      %v515 = vsub.s32 0, %v514
      %v516 = vrot.slane %v274, %v515
      %v517 = vlaneseq
      %v518 = vshrl.u32 %v517, 7
      %v519 = vsub.s32 1, %v518
      %v520 = vrot.slane %v274, %v519
      %v521 = vlaneseq
      %v522 = vshrl.u32 %v521, 7
      %v523 = vsub.s32 2, %v522
      %v524 = vrot.slane %v274, %v523
      %v525 = vlaneseq
      %v526 = vshrl.u32 %v525, 7
      %v527 = vsub.s32 3, %v526
      %v528 = vrot.slane %v274, %v527
      %v533 = vmul.f32 %v511, %v516
      %v534 = vmul.f32 %v510, %v520
      %v535 = vmul.f32 %v509, %v524
      %v536 = vmul.f32 %v508, %v528
      %537 = vrot.lane.b32.xlu0 %v335, 63
      %v538 = vpop.permute.xlu0 %537
      %539 = vrot.lane.b32.xlu0 %v336, 63
      %v540 = vpop.permute.xlu0 %539
      %541 = vrot.lane.b32.xlu0 %v337, 63
      %v542 = vpop.permute.xlu0 %541
      %543 = vrot.lane.b32.xlu0 %v338, 63
      %v544 = vpop.permute.xlu0 %543
      %vm545 = vcmp.lt.s32.totalorder %v354, 63
      %v546 = vsel %vm545, %v542, %v544
      %v547 = vsel %vm545, %v540, %v542
      %v548 = vsel %vm545, %v538, %v540
      %v549 = vsel %vm545, %v544, %v538
      %v551 = vlaneseq
      %v552 = vshrl.u32 %v551, 7
      %v553 = vsub.s32 0, %v552
      %v554 = vrot.slane %v277, %v553
      %v555 = vlaneseq
      %v556 = vshrl.u32 %v555, 7
      %v557 = vsub.s32 1, %v556
      %v558 = vrot.slane %v277, %v557
      %v559 = vlaneseq
      %v560 = vshrl.u32 %v559, 7
      %v561 = vsub.s32 2, %v560
      %v562 = vrot.slane %v277, %v561
      %v563 = vlaneseq
      %v564 = vshrl.u32 %v563, 7
      %v565 = vsub.s32 3, %v564
      %v566 = vrot.slane %v277, %v565
      %v571 = vmul.f32 %v549, %v554
      %v572 = vmul.f32 %v548, %v558
      %v573 = vmul.f32 %v547, %v562
      %v574 = vmul.f32 %v546, %v566
      %575 = vrot.lane.b32.xlu0 %v335, 57
      %v576 = vpop.permute.xlu0 %575
      %577 = vrot.lane.b32.xlu0 %v336, 57
      %v578 = vpop.permute.xlu0 %577
      %579 = vrot.lane.b32.xlu0 %v337, 57
      %v580 = vpop.permute.xlu0 %579
      %581 = vrot.lane.b32.xlu0 %v338, 57
      %v582 = vpop.permute.xlu0 %581
      %vm583 = vcmp.lt.s32.totalorder %v354, 57
      %v584 = vsel %vm583, %v580, %v582
      %v585 = vsel %vm583, %v578, %v580
      %v586 = vsel %vm583, %v576, %v578
      %v587 = vsel %vm583, %v582, %v576
      %v589 = vlaneseq
      %v590 = vshrl.u32 %v589, 7
      %v591 = vsub.s32 0, %v590
      %v592 = vrot.slane %v282, %v591
      %v593 = vlaneseq
      %v594 = vshrl.u32 %v593, 7
      %v595 = vsub.s32 1, %v594
      %v596 = vrot.slane %v282, %v595
      %v597 = vlaneseq
      %v598 = vshrl.u32 %v597, 7
      %v599 = vsub.s32 2, %v598
      %v600 = vrot.slane %v282, %v599
      %v601 = vlaneseq
      %v602 = vshrl.u32 %v601, 7
      %v603 = vsub.s32 3, %v602
      %v604 = vrot.slane %v282, %v603
      %v609 = vmul.f32 %v587, %v592
      %v610 = vmul.f32 %v586, %v596
      %v611 = vmul.f32 %v585, %v600
      %v612 = vmul.f32 %v584, %v604
      %613 = vrot.lane.b32.xlu0 %v335, 56
      %v614 = vpop.permute.xlu0 %613
      %615 = vrot.lane.b32.xlu0 %v336, 56
      %v616 = vpop.permute.xlu0 %615
      %617 = vrot.lane.b32.xlu0 %v337, 56
      %v618 = vpop.permute.xlu0 %617
      %619 = vrot.lane.b32.xlu0 %v338, 56
      %v620 = vpop.permute.xlu0 %619
      %vm621 = vcmp.lt.s32.totalorder %v354, 56
      %v622 = vsel %vm621, %v618, %v620
      %v623 = vsel %vm621, %v616, %v618
      %v624 = vsel %vm621, %v614, %v616
      %v625 = vsel %vm621, %v620, %v614
      %v627 = vlaneseq
      %v628 = vshrl.u32 %v627, 7
      %v629 = vsub.s32 0, %v628
      %v630 = vrot.slane %v284, %v629
      %v631 = vlaneseq
      %v632 = vshrl.u32 %v631, 7
      %v633 = vsub.s32 1, %v632
      %v634 = vrot.slane %v284, %v633
      %v635 = vlaneseq
      %v636 = vshrl.u32 %v635, 7
      %v637 = vsub.s32 2, %v636
      %v638 = vrot.slane %v284, %v637
      %v639 = vlaneseq
      %v640 = vshrl.u32 %v639, 7
      %v641 = vsub.s32 3, %v640
      %v642 = vrot.slane %v284, %v641
      %v647 = vmul.f32 %v625, %v630
      %v648 = vmul.f32 %v624, %v634
      %v649 = vmul.f32 %v623, %v638
      %v650 = vmul.f32 %v622, %v642
      %651 = vrot.lane.b32.xlu0 %v335, 55
      %v652 = vpop.permute.xlu0 %651
      %653 = vrot.lane.b32.xlu0 %v336, 55
      %v654 = vpop.permute.xlu0 %653
      %655 = vrot.lane.b32.xlu0 %v337, 55
      %v656 = vpop.permute.xlu0 %655
      %657 = vrot.lane.b32.xlu0 %v338, 55
      %v658 = vpop.permute.xlu0 %657
      %vm659 = vcmp.lt.s32.totalorder %v354, 55
      %v660 = vsel %vm659, %v656, %v658
      %v661 = vsel %vm659, %v654, %v656
      %v662 = vsel %vm659, %v652, %v654
      %v663 = vsel %vm659, %v658, %v652
      %v665 = vlaneseq
      %v666 = vshrl.u32 %v665, 7
      %v667 = vsub.s32 0, %v666
      %v668 = vrot.slane %v287, %v667
      %v669 = vlaneseq
      %v670 = vshrl.u32 %v669, 7
      %v671 = vsub.s32 1, %v670
      %v672 = vrot.slane %v287, %v671
      %v673 = vlaneseq
      %v674 = vshrl.u32 %v673, 7
      %v675 = vsub.s32 2, %v674
      %v676 = vrot.slane %v287, %v675
      %v677 = vlaneseq
      %v678 = vshrl.u32 %v677, 7
      %v679 = vsub.s32 3, %v678
      %v680 = vrot.slane %v287, %v679
      %v685 = vmul.f32 %v663, %v668
      %v686 = vmul.f32 %v662, %v672
      %v687 = vmul.f32 %v661, %v676
      %v688 = vmul.f32 %v660, %v680
      %689 = vrot.lane.b32.xlu0 %v335, 9
      %v690 = vpop.permute.xlu0 %689
      %691 = vrot.lane.b32.xlu0 %v336, 9
      %v692 = vpop.permute.xlu0 %691
      %693 = vrot.lane.b32.xlu0 %v337, 9
      %v694 = vpop.permute.xlu0 %693
      %695 = vrot.lane.b32.xlu0 %v338, 9
      %v696 = vpop.permute.xlu0 %695
      %vm697 = vcmp.lt.s32.totalorder %v354, 9
      %v698 = vsel %vm697, %v694, %v696
      %v699 = vsel %vm697, %v692, %v694
      %v700 = vsel %vm697, %v690, %v692
      %v701 = vsel %vm697, %v696, %v690
      %v703 = vlaneseq
      %v704 = vshrl.u32 %v703, 7
      %v705 = vsub.s32 0, %v704
      %v706 = vrot.slane %v290, %v705
      %v707 = vlaneseq
      %v708 = vshrl.u32 %v707, 7
      %v709 = vsub.s32 1, %v708
      %v710 = vrot.slane %v290, %v709
      %v711 = vlaneseq
      %v712 = vshrl.u32 %v711, 7
      %v713 = vsub.s32 2, %v712
      %v714 = vrot.slane %v290, %v713
      %v715 = vlaneseq
      %v716 = vshrl.u32 %v715, 7
      %v717 = vsub.s32 3, %v716
      %v718 = vrot.slane %v290, %v717
      %v723 = vmul.f32 %v701, %v706
      %v724 = vmul.f32 %v700, %v710
      %v725 = vmul.f32 %v699, %v714
      %v726 = vmul.f32 %v698, %v718
      %727 = vrot.lane.b32.xlu0 %v335, 8
      %v728 = vpop.permute.xlu0 %727
      %729 = vrot.lane.b32.xlu0 %v336, 8
      %v730 = vpop.permute.xlu0 %729
      %731 = vrot.lane.b32.xlu0 %v337, 8
      %v732 = vpop.permute.xlu0 %731
      %733 = vrot.lane.b32.xlu0 %v338, 8
      %v734 = vpop.permute.xlu0 %733
      %vm735 = vcmp.lt.s32.totalorder %v354, 8
      %v736 = vsel %vm735, %v732, %v734
      %v737 = vsel %vm735, %v730, %v732
      %v738 = vsel %vm735, %v728, %v730
      %v739 = vsel %vm735, %v734, %v728
      %v741 = vlaneseq
      %v742 = vshrl.u32 %v741, 7
      %v743 = vsub.s32 0, %v742
      %v744 = vrot.slane %v292, %v743
      %v745 = vlaneseq
      %v746 = vshrl.u32 %v745, 7
      %v747 = vsub.s32 1, %v746
      %v748 = vrot.slane %v292, %v747
      %v749 = vlaneseq
      %v750 = vshrl.u32 %v749, 7
      %v751 = vsub.s32 2, %v750
      %v752 = vrot.slane %v292, %v751
      %v753 = vlaneseq
      %v754 = vshrl.u32 %v753, 7
      %v755 = vsub.s32 3, %v754
      %v756 = vrot.slane %v292, %v755
      %v761 = vmul.f32 %v739, %v744
      %v762 = vmul.f32 %v738, %v748
      %v763 = vmul.f32 %v737, %v752
      %v764 = vmul.f32 %v736, %v756
      %765 = vrot.lane.b32.xlu0 %v335, 7
      %v766 = vpop.permute.xlu0 %765
      %767 = vrot.lane.b32.xlu0 %v336, 7
      %v768 = vpop.permute.xlu0 %767
      %769 = vrot.lane.b32.xlu0 %v337, 7
      %v770 = vpop.permute.xlu0 %769
      %771 = vrot.lane.b32.xlu0 %v338, 7
      %v772 = vpop.permute.xlu0 %771
      %vm773 = vcmp.lt.s32.totalorder %v354, 7
      %v774 = vsel %vm773, %v770, %v772
      %v775 = vsel %vm773, %v768, %v770
      %v776 = vsel %vm773, %v766, %v768
      %v777 = vsel %vm773, %v772, %v766
      %v779 = vlaneseq
      %v780 = vshrl.u32 %v779, 7
      %v781 = vsub.s32 0, %v780
      %v782 = vrot.slane %v295, %v781
      %v783 = vlaneseq
      %v784 = vshrl.u32 %v783, 7
      %v785 = vsub.s32 1, %v784
      %v786 = vrot.slane %v295, %v785
      %v787 = vlaneseq
      %v788 = vshrl.u32 %v787, 7
      %v789 = vsub.s32 2, %v788
      %v790 = vrot.slane %v295, %v789
      %v791 = vlaneseq
      %v792 = vshrl.u32 %v791, 7
      %v793 = vsub.s32 3, %v792
      %v794 = vrot.slane %v295, %v793
      %v799 = vmul.f32 %v777, %v782
      %v800 = vmul.f32 %v776, %v786
      %v801 = vmul.f32 %v775, %v790
      %v802 = vmul.f32 %v774, %v794
      %803 = vrot.lane.b32.xlu0 %v335, 1
      %v804 = vpop.permute.xlu0 %803
      %805 = vrot.lane.b32.xlu0 %v336, 1
      %v806 = vpop.permute.xlu0 %805
      %807 = vrot.lane.b32.xlu0 %v337, 1
      %v808 = vpop.permute.xlu0 %807
      %809 = vrot.lane.b32.xlu0 %v338, 1
      %v810 = vpop.permute.xlu0 %809
      %vm811 = vcmp.lt.s32.totalorder %v354, 1
      %v812 = vsel %vm811, %v808, %v810
      %v813 = vsel %vm811, %v806, %v808
      %v814 = vsel %vm811, %v804, %v806
      %v815 = vsel %vm811, %v810, %v804
      %v817 = vlaneseq
      %v818 = vshrl.u32 %v817, 7
      %v819 = vsub.s32 0, %v818
      %v820 = vrot.slane %v297, %v819
      %v821 = vlaneseq
      %v822 = vshrl.u32 %v821, 7
      %v823 = vsub.s32 1, %v822
      %v824 = vrot.slane %v297, %v823
      %v825 = vlaneseq
      %v826 = vshrl.u32 %v825, 7
      %v827 = vsub.s32 2, %v826
      %v828 = vrot.slane %v297, %v827
      %v829 = vlaneseq
      %v830 = vshrl.u32 %v829, 7
      %v831 = vsub.s32 3, %v830
      %v832 = vrot.slane %v297, %v831
      %v837 = vmul.f32 %v815, %v820
      %v838 = vmul.f32 %v814, %v824
      %v839 = vmul.f32 %v813, %v828
      %v840 = vmul.f32 %v812, %v832
      %841 = vrot.lane.b32.xlu0 %v335, 127
      %v842 = vpop.permute.xlu0 %841
      %843 = vrot.lane.b32.xlu0 %v336, 127
      %v844 = vpop.permute.xlu0 %843
      %845 = vrot.lane.b32.xlu0 %v337, 127
      %v846 = vpop.permute.xlu0 %845
      %847 = vrot.lane.b32.xlu0 %v338, 127
      %v848 = vpop.permute.xlu0 %847
      %vm849 = vcmp.lt.s32.totalorder %v354, 127
      %v850 = vsel %vm849, %v846, %v848
      %v851 = vsel %vm849, %v844, %v846
      %v852 = vsel %vm849, %v842, %v844
      %v853 = vsel %vm849, %v848, %v842
      %v855 = vlaneseq
      %v856 = vshrl.u32 %v855, 7
      %v857 = vsub.s32 0, %v856
      %v858 = vrot.slane %v299, %v857
      %v859 = vlaneseq
      %v860 = vshrl.u32 %v859, 7
      %v861 = vsub.s32 1, %v860
      %v862 = vrot.slane %v299, %v861
      %v863 = vlaneseq
      %v864 = vshrl.u32 %v863, 7
      %v865 = vsub.s32 2, %v864
      %v866 = vrot.slane %v299, %v865
      %v867 = vlaneseq
      %v868 = vshrl.u32 %v867, 7
      %v869 = vsub.s32 3, %v868
      %v870 = vrot.slane %v299, %v869
      %v875 = vmul.f32 %v852, %v858
      %v876 = vmul.f32 %v851, %v862
      %v877 = vmul.f32 %v850, %v866
      %v878 = vmul.f32 %v853, %v870
      %879 = vrot.lane.b32.xlu0 %v335, 121
      %v880 = vpop.permute.xlu0 %879
      %881 = vrot.lane.b32.xlu0 %v336, 121
      %v882 = vpop.permute.xlu0 %881
      %883 = vrot.lane.b32.xlu0 %v337, 121
      %v884 = vpop.permute.xlu0 %883
      %885 = vrot.lane.b32.xlu0 %v338, 121
      %v886 = vpop.permute.xlu0 %885
      %vm887 = vcmp.lt.s32.totalorder %v354, 121
      %v888 = vsel %vm887, %v884, %v886
      %v889 = vsel %vm887, %v882, %v884
      %v890 = vsel %vm887, %v880, %v882
      %v891 = vsel %vm887, %v886, %v880
      %v893 = vlaneseq
      %v894 = vshrl.u32 %v893, 7
      %v895 = vsub.s32 0, %v894
      %v896 = vrot.slane %v302, %v895
      %v897 = vlaneseq
      %v898 = vshrl.u32 %v897, 7
      %v899 = vsub.s32 1, %v898
      %v900 = vrot.slane %v302, %v899
      %v901 = vlaneseq
      %v902 = vshrl.u32 %v901, 7
      %v903 = vsub.s32 2, %v902
      %v904 = vrot.slane %v302, %v903
      %v905 = vlaneseq
      %v906 = vshrl.u32 %v905, 7
      %v907 = vsub.s32 3, %v906
      %v908 = vrot.slane %v302, %v907
      %v913 = vmul.f32 %v890, %v896
      %v914 = vmul.f32 %v889, %v900
      %v915 = vmul.f32 %v888, %v904
      %v916 = vmul.f32 %v891, %v908
      %917 = vrot.lane.b32.xlu0 %v335, 120
      %v918 = vpop.permute.xlu0 %917
      %919 = vrot.lane.b32.xlu0 %v336, 120
      %v920 = vpop.permute.xlu0 %919
      %921 = vrot.lane.b32.xlu0 %v337, 120
      %v922 = vpop.permute.xlu0 %921
      %923 = vrot.lane.b32.xlu0 %v338, 120
      %v924 = vpop.permute.xlu0 %923
      %vm925 = vcmp.lt.s32.totalorder %v354, 120
      %v926 = vsel %vm925, %v922, %v924
      %v927 = vsel %vm925, %v920, %v922
      %v928 = vsel %vm925, %v918, %v920
      %v929 = vsel %vm925, %v924, %v918
      %v931 = vlaneseq
      %v932 = vshrl.u32 %v931, 7
      %v933 = vsub.s32 0, %v932
      %v934 = vrot.slane %v304, %v933
      %v935 = vlaneseq
      %v936 = vshrl.u32 %v935, 7
      %v937 = vsub.s32 1, %v936
      %v938 = vrot.slane %v304, %v937
      %v939 = vlaneseq
      %v940 = vshrl.u32 %v939, 7
      %v941 = vsub.s32 2, %v940
      %v942 = vrot.slane %v304, %v941
      %v943 = vlaneseq
      %v944 = vshrl.u32 %v943, 7
      %v945 = vsub.s32 3, %v944
      %v946 = vrot.slane %v304, %v945
      %v951 = vmul.f32 %v928, %v934
      %v952 = vmul.f32 %v927, %v938
      %v953 = vmul.f32 %v926, %v942
      %v954 = vmul.f32 %v929, %v946
      %955 = vrot.lane.b32.xlu0 %v335, 119
      %v956 = vpop.permute.xlu0 %955
      %957 = vrot.lane.b32.xlu0 %v336, 119
      %v958 = vpop.permute.xlu0 %957
      %959 = vrot.lane.b32.xlu0 %v337, 119
      %v960 = vpop.permute.xlu0 %959
      %961 = vrot.lane.b32.xlu0 %v338, 119
      %v962 = vpop.permute.xlu0 %961
      %vm963 = vcmp.lt.s32.totalorder %v354, 119
      %v964 = vsel %vm963, %v960, %v962
      %v965 = vsel %vm963, %v958, %v960
      %v966 = vsel %vm963, %v956, %v958
      %v967 = vsel %vm963, %v962, %v956
      %v969 = vlaneseq
      %v970 = vshrl.u32 %v969, 7
      %v971 = vsub.s32 0, %v970
      %v972 = vrot.slane %v307, %v971
      %v973 = vlaneseq
      %v974 = vshrl.u32 %v973, 7
      %v975 = vsub.s32 1, %v974
      %v976 = vrot.slane %v307, %v975
      %v977 = vlaneseq
      %v978 = vshrl.u32 %v977, 7
      %v979 = vsub.s32 2, %v978
      %v980 = vrot.slane %v307, %v979
      %v981 = vlaneseq
      %v982 = vshrl.u32 %v981, 7
      %v983 = vsub.s32 3, %v982
      %v984 = vrot.slane %v307, %v983
      %v989 = vmul.f32 %v966, %v972
      %v990 = vmul.f32 %v965, %v976
      %v991 = vmul.f32 %v964, %v980
      %v992 = vmul.f32 %v967, %v984
      %v994 = vlaneseq
      %v995 = vshrl.u32 %v994, 7
      %v996 = vsub.s32 0, %v995
      %v997 = vrot.slane %v312, %v996
      %v998 = vlaneseq
      %v999 = vshrl.u32 %v998, 7
      %v1000 = vsub.s32 1, %v999
      %v1001 = vrot.slane %v312, %v1000
      %v1002 = vlaneseq
      %v1003 = vshrl.u32 %v1002, 7
      %v1004 = vsub.s32 2, %v1003
      %v1005 = vrot.slane %v312, %v1004
      %v1006 = vlaneseq
      %v1007 = vshrl.u32 %v1006, 7
      %v1008 = vsub.s32 3, %v1007
      %v1009 = vrot.slane %v312, %v1008
      %v1014 = vmul.f32 %v358, %v997
      %v1015 = vmul.f32 %v357, %v1001
      %v1016 = vmul.f32 %v356, %v1005
      %v1017 = vmul.f32 %v359, %v1009
      %v1019 = vlaneseq
      %v1020 = vshrl.u32 %v1019, 7
      %v1021 = vsub.s32 0, %v1020
      %v1022 = vrot.slane %v314, %v1021
      %v1023 = vlaneseq
      %v1024 = vshrl.u32 %v1023, 7
      %v1025 = vsub.s32 1, %v1024
      %v1026 = vrot.slane %v314, %v1025
      %v1027 = vlaneseq
      %v1028 = vshrl.u32 %v1027, 7
      %v1029 = vsub.s32 2, %v1028
      %v1030 = vrot.slane %v314, %v1029
      %v1031 = vlaneseq
      %v1032 = vshrl.u32 %v1031, 7
      %v1033 = vsub.s32 3, %v1032
      %v1034 = vrot.slane %v314, %v1033
      %v1039 = vmul.f32 %v396, %v1022
      %v1040 = vmul.f32 %v395, %v1026
      %v1041 = vmul.f32 %v394, %v1030
      %v1042 = vmul.f32 %v397, %v1034
      %v1044 = vlaneseq
      %v1045 = vshrl.u32 %v1044, 7
      %v1046 = vsub.s32 0, %v1045
      %v1047 = vrot.slane %v317, %v1046
      %v1048 = vlaneseq
      %v1049 = vshrl.u32 %v1048, 7
      %v1050 = vsub.s32 1, %v1049
      %v1051 = vrot.slane %v317, %v1050
      %v1052 = vlaneseq
      %v1053 = vshrl.u32 %v1052, 7
      %v1054 = vsub.s32 2, %v1053
      %v1055 = vrot.slane %v317, %v1054
      %v1056 = vlaneseq
      %v1057 = vshrl.u32 %v1056, 7
      %v1058 = vsub.s32 3, %v1057
      %v1059 = vrot.slane %v317, %v1058
      %v1064 = vmul.f32 %v434, %v1047
      %v1065 = vmul.f32 %v433, %v1051
      %v1066 = vmul.f32 %v432, %v1055
      %v1067 = vmul.f32 %v435, %v1059
      %v1069 = vlaneseq
      %v1070 = vshrl.u32 %v1069, 7
      %v1071 = vsub.s32 0, %v1070
      %v1072 = vrot.slane %v320, %v1071
      %v1073 = vlaneseq
      %v1074 = vshrl.u32 %v1073, 7
      %v1075 = vsub.s32 1, %v1074
      %v1076 = vrot.slane %v320, %v1075
      %v1077 = vlaneseq
      %v1078 = vshrl.u32 %v1077, 7
      %v1079 = vsub.s32 2, %v1078
      %v1080 = vrot.slane %v320, %v1079
      %v1081 = vlaneseq
      %v1082 = vshrl.u32 %v1081, 7
      %v1083 = vsub.s32 3, %v1082
      %v1084 = vrot.slane %v320, %v1083
      %v1089 = vmul.f32 %v472, %v1072
      %v1090 = vmul.f32 %v471, %v1076
      %v1091 = vmul.f32 %v470, %v1080
      %v1092 = vmul.f32 %v473, %v1084
      %v1094 = vlaneseq
      %v1095 = vshrl.u32 %v1094, 7
      %v1096 = vsub.s32 0, %v1095
      %v1097 = vrot.slane %v322, %v1096
      %v1098 = vlaneseq
      %v1099 = vshrl.u32 %v1098, 7
      %v1100 = vsub.s32 1, %v1099
      %v1101 = vrot.slane %v322, %v1100
      %v1102 = vlaneseq
      %v1103 = vshrl.u32 %v1102, 7
      %v1104 = vsub.s32 2, %v1103
      %v1105 = vrot.slane %v322, %v1104
      %v1106 = vlaneseq
      %v1107 = vshrl.u32 %v1106, 7
      %v1108 = vsub.s32 3, %v1107
      %v1109 = vrot.slane %v322, %v1108
      %v1114 = vmul.f32 %v510, %v1097
      %v1115 = vmul.f32 %v509, %v1101
      %v1116 = vmul.f32 %v508, %v1105
      %v1117 = vmul.f32 %v511, %v1109
      %v1119 = vlaneseq
      %v1120 = vshrl.u32 %v1119, 7
      %v1121 = vsub.s32 0, %v1120
      %v1122 = vrot.slane %v325, %v1121
      %v1123 = vlaneseq
      %v1124 = vshrl.u32 %v1123, 7
      %v1125 = vsub.s32 1, %v1124
      %v1126 = vrot.slane %v325, %v1125
      %v1127 = vlaneseq
      %v1128 = vshrl.u32 %v1127, 7
      %v1129 = vsub.s32 2, %v1128
      %v1130 = vrot.slane %v325, %v1129
      %v1131 = vlaneseq
      %v1132 = vshrl.u32 %v1131, 7
      %v1133 = vsub.s32 3, %v1132
      %v1134 = vrot.slane %v325, %v1133
      %v1139 = vmul.f32 %v548, %v1122
      %v1140 = vmul.f32 %v547, %v1126
      %v1141 = vmul.f32 %v546, %v1130
      %v1142 = vmul.f32 %v549, %v1134
      %v1144 = vlaneseq
      %v1145 = vshrl.u32 %v1144, 7
      %v1146 = vsub.s32 0, %v1145
      %v1147 = vrot.slane %v329, %v1146
      %v1148 = vlaneseq
      %v1149 = vshrl.u32 %v1148, 7
      %v1150 = vsub.s32 1, %v1149
      %v1151 = vrot.slane %v329, %v1150
      %v1152 = vlaneseq
      %v1153 = vshrl.u32 %v1152, 7
      %v1154 = vsub.s32 2, %v1153
      %v1155 = vrot.slane %v329, %v1154
      %v1156 = vlaneseq
      %v1157 = vshrl.u32 %v1156, 7
      %v1158 = vsub.s32 3, %v1157
      %v1159 = vrot.slane %v329, %v1158
      %v1164 = vmul.f32 %v586, %v1147
      %v1165 = vmul.f32 %v585, %v1151
      %v1166 = vmul.f32 %v584, %v1155
      %v1167 = vmul.f32 %v587, %v1159
      %v1169 = vlaneseq
      %v1170 = vshrl.u32 %v1169, 7
      %v1171 = vsub.s32 0, %v1170
      %v1172 = vrot.slane %v331, %v1171
      %v1173 = vlaneseq
      %v1174 = vshrl.u32 %v1173, 7
      %v1175 = vsub.s32 1, %v1174
      %v1176 = vrot.slane %v331, %v1175
      %v1177 = vlaneseq
      %v1178 = vshrl.u32 %v1177, 7
      %v1179 = vsub.s32 2, %v1178
      %v1180 = vrot.slane %v331, %v1179
      %v1181 = vlaneseq
      %v1182 = vshrl.u32 %v1181, 7
      %v1183 = vsub.s32 3, %v1182
      %v1184 = vrot.slane %v331, %v1183
      %v1189 = vmul.f32 %v624, %v1172
      %v1190 = vmul.f32 %v623, %v1176
      %v1191 = vmul.f32 %v622, %v1180
      %v1192 = vmul.f32 %v625, %v1184
      %v1194 = vlaneseq
      %v1195 = vshrl.u32 %v1194, 7
      %v1196 = vsub.s32 0, %v1195
      %v1197 = vrot.slane %v334, %v1196
      %v1198 = vlaneseq
      %v1199 = vshrl.u32 %v1198, 7
      %v1200 = vsub.s32 1, %v1199
      %v1201 = vrot.slane %v334, %v1200
      %v1202 = vlaneseq
      %v1203 = vshrl.u32 %v1202, 7
      %v1204 = vsub.s32 2, %v1203
      %v1205 = vrot.slane %v334, %v1204
      %v1206 = vlaneseq
      %v1207 = vshrl.u32 %v1206, 7
      %v1208 = vsub.s32 3, %v1207
      %v1209 = vrot.slane %v334, %v1208
      %v1214 = vmul.f32 %v662, %v1197
      %v1215 = vmul.f32 %v661, %v1201
      %v1216 = vmul.f32 %v660, %v1205
      %v1217 = vmul.f32 %v663, %v1209
      %1219 = vset.pattern.permute.xlu0 0
      %1220 = vperm.xlu0 %1219, %v343
      %v1221 = vpop.permute.xlu0 %1220
      %1224 = vset.pattern.permute.xlu0 0
      %1225 = vperm.xlu0 %1224, %v344
      %v1226 = vpop.permute.xlu0 %1225
      %vm1228 = vcmask 719872
      %v1230 = vsel %vm1228, %v340, 0
      %v1233 = vsel %vm1228, %v342, 0
      %1235 = vmatprep.subr.mxu0 %v914
      %1236 = vmatpush1.msra.mxu0 %v913
      %1237 = vmatprep.subr.mxu0 %v876
      %1238 = vmatpush1.msra.mxu0 %v875
      %1239 = vmatprep.subr.mxu0 %v336
      %1240 = vmatpush1.msra.mxu0 %v335
      %1241 = vmatprep.subr.mxu0 %v838
      %1242 = vmatpush1.msra.mxu0 %v837
      %1243 = vmatprep.subr.mxu0 %v800
      %1244 = vmatpush1.msra.mxu0 %v799
      %1245 = vmatprep.subr.mxu0 %v762
      %1246 = vmatpush1.msra.mxu0 %v761
      %1247 = vmatprep.subr.mxu0 %v724
      %1248 = vmatpush1.msra.mxu0 %v723
      %1249 = vmatprep.subr.mxu0 %v686
      %1250 = vmatpush1.msra.mxu0 %v685
      %1251 = vmatprep.subr.mxu0 %v648
      %1252 = vmatpush1.msra.mxu0 %v647
      %1253 = vmatprep.subr.mxu0 %v610
      %1254 = vmatpush1.msra.mxu0 %v609
      %1255 = vmatprep.subr.mxu0 %v572
      %1256 = vmatpush1.msra.mxu0 %v571
      %1257 = vmatprep.subr.mxu0 %v534
      %1258 = vmatpush1.msra.mxu0 %v533
      %1259 = vmatprep.subr.mxu0 %v496
      %1260 = vmatpush1.msra.mxu0 %v495
      %1261 = vmatprep.subr.mxu0 %v458
      %1262 = vmatpush1.msra.mxu0 %v457
      %1263 = vmatprep.subr.mxu0 %v420
      %1264 = vmatpush1.msra.mxu0 %v419
      %1265 = vmatprep.subr.mxu0 %v382
      %1266 = vmatpush1.msra.mxu0 %v381
      %1267 = vmatprep.subr.mxu0 0.0
      %1268 = vmatpush2.msra.mxu0 0.0
      %1269 = vmatprep.subr.mxu0 0.0
      %1270 = vmatpush2.msra.mxu0 0.0
      %1271 = vmatprep.subr.mxu0 0.0
      %1272 = vmatpush2.msra.mxu0 0.0
      %1273 = vmatprep.subr.mxu0 0.0
      %1274 = vmatpush2.msra.mxu0 0.0
      %1275 = vmatprep.subr.mxu0 0.0
      %1276 = vmatpush2.msra.mxu0 0.0
      %1277 = vmatprep.subr.mxu0 %v1215
      %1278 = vmatpush2.msra.mxu0 %v1214
      %1279 = vmatprep.subr.mxu0 %v1190
      %1280 = vmatpush2.msra.mxu0 %v1189
      %1281 = vmatprep.subr.mxu0 %v1165
      %1282 = vmatpush2.msra.mxu0 %v1164
      %1283 = vmatprep.subr.mxu0 %v1140
      %1284 = vmatpush2.msra.mxu0 %v1139
      %1285 = vmatprep.subr.mxu0 %v1115
      %1286 = vmatpush2.msra.mxu0 %v1114
      %1287 = vmatprep.subr.mxu0 %v1090
      %1288 = vmatpush2.msra.mxu0 %v1089
      %1289 = vmatprep.subr.mxu0 %v1065
      %1290 = vmatpush2.msra.mxu0 %v1064
      %1291 = vmatprep.subr.mxu0 %v1040
      %1292 = vmatpush2.msra.mxu0 %v1039
      %1293 = vmatprep.subr.mxu0 %v1015
      %1294 = vmatpush2.msra.mxu0 %v1014
      %1295 = vmatprep.subr.mxu0 %v990
      %1296 = vmatpush2.msra.mxu0 %v989
      %1297 = vmatprep.subr.mxu0 %v952
      %1298 = vmatpush2.msra.mxu0 %v951
      %1299 = vmatprep.mubr.f32.mxu0 %v1230
      %1300 = vmatmul.mubr.f32.gmra.mxu0 %v339
      %v1301 = vpop.f32.mrf.mxu0
      %v1302 = vadd.f32 %v1221, %v1301
      %v1303 = vpop.f32.mrf.mxu0
      %v1304 = vadd.f32 %v1221, %v1303
      %1305 = vmatprep.mubr.f32.mxu0 %v1233
      %1306 = vmatmul.mubr.f32.gmra.mxu0 %v341
      %v1307 = vpop.f32.mrf.mxu0
      %v1308 = vadd.f32 %v1226, %v1307
      %v1309 = vpop.f32.mrf.mxu0
      %v1310 = vadd.f32 %v1226, %v1309
      %1311 = vdwg.mxu0
      %1312 = vmatprep.subr.mxu0 %v916
      %1313 = vmatpush1.msra.mxu0 %v915
      %1314 = vmatprep.subr.mxu0 %v878
      %1315 = vmatpush1.msra.mxu0 %v877
      %1316 = vmatprep.subr.mxu0 %v338
      %1317 = vmatpush1.msra.mxu0 %v337
      %1318 = vmatprep.subr.mxu0 %v840
      %1319 = vmatpush1.msra.mxu0 %v839
      %1320 = vmatprep.subr.mxu0 %v802
      %1321 = vmatpush1.msra.mxu0 %v801
      %1322 = vmatprep.subr.mxu0 %v764
      %1323 = vmatpush1.msra.mxu0 %v763
      %1324 = vmatprep.subr.mxu0 %v726
      %1325 = vmatpush1.msra.mxu0 %v725
      %1326 = vmatprep.subr.mxu0 %v688
      %1327 = vmatpush1.msra.mxu0 %v687
      %1328 = vmatprep.subr.mxu0 %v650
      %1329 = vmatpush1.msra.mxu0 %v649
      %1330 = vmatprep.subr.mxu0 %v612
      %1331 = vmatpush1.msra.mxu0 %v611
      %1332 = vmatprep.subr.mxu0 %v574
      %1333 = vmatpush1.msra.mxu0 %v573
      %1334 = vmatprep.subr.mxu0 %v536
      %1335 = vmatpush1.msra.mxu0 %v535
      %1336 = vmatprep.subr.mxu0 %v498
      %1337 = vmatpush1.msra.mxu0 %v497
      %1338 = vmatprep.subr.mxu0 %v460
      %1339 = vmatpush1.msra.mxu0 %v459
      %1340 = vmatprep.subr.mxu0 %v422
      %1341 = vmatpush1.msra.mxu0 %v421
      %1342 = vmatprep.subr.mxu0 %v384
      %1343 = vmatpush1.msra.mxu0 %v383
      %1344 = vmatprep.subr.mxu0 0.0
      %1345 = vmatpush2.msra.mxu0 0.0
      %1346 = vmatprep.subr.mxu0 0.0
      %1347 = vmatpush2.msra.mxu0 0.0
      %1348 = vmatprep.subr.mxu0 0.0
      %1349 = vmatpush2.msra.mxu0 0.0
      %1350 = vmatprep.subr.mxu0 0.0
      %1351 = vmatpush2.msra.mxu0 0.0
      %1352 = vmatprep.subr.mxu0 0.0
      %1353 = vmatpush2.msra.mxu0 0.0
      %1354 = vmatprep.subr.mxu0 %v1217
      %1355 = vmatpush2.msra.mxu0 %v1216
      %1356 = vmatprep.subr.mxu0 %v1192
      %1357 = vmatpush2.msra.mxu0 %v1191
      %1358 = vmatprep.subr.mxu0 %v1167
      %1359 = vmatpush2.msra.mxu0 %v1166
      %1360 = vmatprep.subr.mxu0 %v1142
      %1361 = vmatpush2.msra.mxu0 %v1141
      %1362 = vmatprep.subr.mxu0 %v1117
      %1363 = vmatpush2.msra.mxu0 %v1116
      %1364 = vmatprep.subr.mxu0 %v1092
      %1365 = vmatpush2.msra.mxu0 %v1091
      %1366 = vmatprep.subr.mxu0 %v1067
      %1367 = vmatpush2.msra.mxu0 %v1066
      %1368 = vmatprep.subr.mxu0 %v1042
      %1369 = vmatpush2.msra.mxu0 %v1041
      %1370 = vmatprep.subr.mxu0 %v1017
      %1371 = vmatpush2.msra.mxu0 %v1016
      %1372 = vmatprep.subr.mxu0 %v992
      %1373 = vmatpush2.msra.mxu0 %v991
      %1374 = vmatprep.subr.mxu0 %v954
      %1375 = vmatpush2.msra.mxu0 %v953
      %1376 = vmatprep.mubr.f32.mxu0 %v1230
      %1377 = vmatmul.mubr.f32.gmra.mxu0 %v339
      %v1378 = vpop.f32.mrf.mxu0
      %v1379 = vadd.f32 %v1221, %v1378
      %v1380 = vpop.f32.mrf.mxu0
      %v1381 = vadd.f32 %v1221, %v1380
      %1382 = vmatprep.mubr.f32.mxu0 %v1233
      %1383 = vmatmul.mubr.f32.gmra.mxu0 %v341
      %v1384 = vpop.f32.mrf.mxu0
      %v1385 = vadd.f32 %v1226, %v1384
      %v1386 = vpop.f32.mrf.mxu0
      %v1387 = vadd.f32 %v1226, %v1386
      %1388 = vdwg.mxu0
      %v1389 = vadd.f32 %v1302, %v1304
      %v1390 = vadd.f32 %v1389, %v1379
      %v1391 = vadd.f32 %v1390, %v1381
      %1392 = vadd.xlane.f32.xlu0 %v1391
      %v1393 = vpop.xlane.xlu0 %1392
      %v1394 = vadd.f32 %v1308, %v1310
      %v1395 = vadd.f32 %v1394, %v1385
      %v1396 = vadd.f32 %v1395, %v1387
      %1397 = vadd.xlane.f32.xlu0 %v1396
      %v1398 = vpop.xlane.xlu0 %1397
      %v1399 = vmul.f32 %v1393, 0.001953125
      %v1400 = vmul.f32 %v1398, 0.001953125
      %v1401 = vmul.f32 %v1302, %v1302
      %v1402 = vmul.f32 %v1304, %v1304
      %v1403 = vmul.f32 %v1379, %v1379
      %v1404 = vmul.f32 %v1381, %v1381
      %v1405 = vmul.f32 %v1308, %v1308
      %v1406 = vmul.f32 %v1310, %v1310
      %v1407 = vmul.f32 %v1385, %v1385
      %v1408 = vmul.f32 %v1387, %v1387
      %v1409 = vadd.f32 %v1401, %v1402
      %v1410 = vadd.f32 %v1409, %v1403
      %v1411 = vadd.f32 %v1410, %v1404
      %1412 = vadd.xlane.f32.xlu0 %v1411
      %v1413 = vpop.xlane.xlu0 %1412
      %v1414 = vadd.f32 %v1405, %v1406
      %v1415 = vadd.f32 %v1414, %v1407
      %v1416 = vadd.f32 %v1415, %v1408
      %1417 = vadd.xlane.f32.xlu0 %v1416
      %v1418 = vpop.xlane.xlu0 %1417
      %v1419 = vmul.f32 %v1413, 0.001953125
      %v1420 = vmul.f32 %v1418, 0.001953125
      %v1421 = vmul.f32 %v1399, %v1399
      %v1422 = vmul.f32 %v1400, %v1400
      %v1423 = vsub.f32 %v1419, %v1421
      %v1424 = vsub.f32 %v1420, %v1422
      %v1425 = vmax.f32 %v1423, 0.0
      %v1426 = vmax.f32 %v1424, 0.0
      %v1427 = vsub.f32 %v1302, %v1399
      %v1428 = vsub.f32 %v1304, %v1399
      %v1429 = vsub.f32 %v1379, %v1399
      %v1430 = vsub.f32 %v1381, %v1399
      %v1431 = vsub.f32 %v1308, %v1400
      %v1432 = vsub.f32 %v1310, %v1400
      %v1433 = vsub.f32 %v1385, %v1400
      %v1434 = vsub.f32 %v1387, %v1400
      %v1435 = vadd.f32 %v1425, 1e-05
      %v1436 = vadd.f32 %v1426, 1e-05
      %v1437 = vrsqrt.pop %v1435
      %v1438 = vrsqrt.pop %v1436
      %v1439 = vmul.f32 %v1427, %v1437
      %v1440 = vmul.f32 %v1428, %v1437
      %v1441 = vmul.f32 %v1429, %v1437
      %v1442 = vmul.f32 %v1430, %v1437
      %v1443 = vmul.f32 %v1431, %v1438
      %v1444 = vmul.f32 %v1432, %v1438
      %v1445 = vmul.f32 %v1433, %v1438
      %v1446 = vmul.f32 %v1434, %v1438
      %v1447 = vmax.f32 %v1439, 0.0
      %v1448 = vmax.f32 %v1440, 0.0
      %v1449 = vmax.f32 %v1441, 0.0
      %v1450 = vmax.f32 %v1442, 0.0
      %v1451 = vmax.f32 %v1443, 0.0
      %v1452 = vmax.f32 %v1444, 0.0
      %v1453 = vmax.f32 %v1445, 0.0
      %v1454 = vmax.f32 %v1446, 0.0
      %v1455 = vld [vmem:[%s4] sm:$0xff]
      %v1456 = vld [vmem:[%s4 + $0x8] sm:$0xff]
      %v1457 = vld [vmem:[%s4 + $0x10] sm:$0xff]
      %v1458 = vld [vmem:[%s4 + $0x18] sm:$0xff]
      %v1459 = vld [vmem:[%s4 + $0x20] sm:$0xff]
      %v1460 = vld [vmem:[%s4 + $0x28] sm:$0xff]
      %v1461 = vld [vmem:[%s4 + $0x30] sm:$0xff]
      %v1462 = vld [vmem:[%s4 + $0x38] sm:$0xff]
      %v1463 = vld [vmem:[%s5] sm:$0xff]
      %v1464 = vld [vmem:[%s5 + $0x8] sm:$0xff]
      %1465 = vrot.lane.b32.xlu0 %v1447, 73
      %v1466 = vpop.permute.xlu0 %1465
      %1467 = vrot.lane.b32.xlu0 %v1451, 73
      %v1468 = vpop.permute.xlu0 %1467
      %1469 = vrot.lane.b32.xlu0 %v1448, 73
      %v1470 = vpop.permute.xlu0 %1469
      %1471 = vrot.lane.b32.xlu0 %v1452, 73
      %v1472 = vpop.permute.xlu0 %1471
      %1473 = vrot.lane.b32.xlu0 %v1449, 73
      %v1474 = vpop.permute.xlu0 %1473
      %1475 = vrot.lane.b32.xlu0 %v1453, 73
      %v1476 = vpop.permute.xlu0 %1475
      %1477 = vrot.lane.b32.xlu0 %v1450, 73
      %v1478 = vpop.permute.xlu0 %1477
      %1479 = vrot.lane.b32.xlu0 %v1454, 73
      %v1480 = vpop.permute.xlu0 %1479
      %v1481 = vsel %vm355, %v1474, %v1478
      %v1482 = vsel %vm355, %v1476, %v1480
      %v1483 = vsel %vm355, %v1470, %v1474
      %v1484 = vsel %vm355, %v1472, %v1476
      %v1485 = vsel %vm355, %v1466, %v1470
      %v1486 = vsel %vm355, %v1468, %v1472
      %v1487 = vsel %vm355, %v1478, %v1466
      %v1488 = vsel %vm355, %v1480, %v1468
      %v1489 = vmul.f32 %v1487, %v364
      %v1490 = vmul.f32 %v1485, %v368
      %v1491 = vmul.f32 %v1483, %v372
      %v1492 = vmul.f32 %v1481, %v376
      %v1493 = vmul.f32 %v1488, %v364
      %v1494 = vmul.f32 %v1486, %v368
      %v1495 = vmul.f32 %v1484, %v372
      %v1496 = vmul.f32 %v1482, %v376
      %1497 = vrot.lane.b32.xlu0 %v1447, 72
      %v1498 = vpop.permute.xlu0 %1497
      %1499 = vrot.lane.b32.xlu0 %v1451, 72
      %v1500 = vpop.permute.xlu0 %1499
      %1501 = vrot.lane.b32.xlu0 %v1448, 72
      %v1502 = vpop.permute.xlu0 %1501
      %1503 = vrot.lane.b32.xlu0 %v1452, 72
      %v1504 = vpop.permute.xlu0 %1503
      %1505 = vrot.lane.b32.xlu0 %v1449, 72
      %v1506 = vpop.permute.xlu0 %1505
      %1507 = vrot.lane.b32.xlu0 %v1453, 72
      %v1508 = vpop.permute.xlu0 %1507
      %1509 = vrot.lane.b32.xlu0 %v1450, 72
      %v1510 = vpop.permute.xlu0 %1509
      %1511 = vrot.lane.b32.xlu0 %v1454, 72
      %v1512 = vpop.permute.xlu0 %1511
      %v1513 = vsel %vm393, %v1506, %v1510
      %v1514 = vsel %vm393, %v1508, %v1512
      %v1515 = vsel %vm393, %v1502, %v1506
      %v1516 = vsel %vm393, %v1504, %v1508
      %v1517 = vsel %vm393, %v1498, %v1502
      %v1518 = vsel %vm393, %v1500, %v1504
      %v1519 = vsel %vm393, %v1510, %v1498
      %v1520 = vsel %vm393, %v1512, %v1500
      %v1521 = vmul.f32 %v1519, %v402
      %v1522 = vmul.f32 %v1517, %v406
      %v1523 = vmul.f32 %v1515, %v410
      %v1524 = vmul.f32 %v1513, %v414
      %v1525 = vmul.f32 %v1520, %v402
      %v1526 = vmul.f32 %v1518, %v406
      %v1527 = vmul.f32 %v1516, %v410
      %v1528 = vmul.f32 %v1514, %v414
      %1529 = vrot.lane.b32.xlu0 %v1447, 71
      %v1530 = vpop.permute.xlu0 %1529
      %1531 = vrot.lane.b32.xlu0 %v1451, 71
      %v1532 = vpop.permute.xlu0 %1531
      %1533 = vrot.lane.b32.xlu0 %v1448, 71
      %v1534 = vpop.permute.xlu0 %1533
      %1535 = vrot.lane.b32.xlu0 %v1452, 71
      %v1536 = vpop.permute.xlu0 %1535
      %1537 = vrot.lane.b32.xlu0 %v1449, 71
      %v1538 = vpop.permute.xlu0 %1537
      %1539 = vrot.lane.b32.xlu0 %v1453, 71
      %v1540 = vpop.permute.xlu0 %1539
      %1541 = vrot.lane.b32.xlu0 %v1450, 71
      %v1542 = vpop.permute.xlu0 %1541
      %1543 = vrot.lane.b32.xlu0 %v1454, 71
      %v1544 = vpop.permute.xlu0 %1543
      %v1545 = vsel %vm431, %v1538, %v1542
      %v1546 = vsel %vm431, %v1540, %v1544
      %v1547 = vsel %vm431, %v1534, %v1538
      %v1548 = vsel %vm431, %v1536, %v1540
      %v1549 = vsel %vm431, %v1530, %v1534
      %v1550 = vsel %vm431, %v1532, %v1536
      %v1551 = vsel %vm431, %v1542, %v1530
      %v1552 = vsel %vm431, %v1544, %v1532
      %v1553 = vmul.f32 %v1551, %v440
      %v1554 = vmul.f32 %v1549, %v444
      %v1555 = vmul.f32 %v1547, %v448
      %v1556 = vmul.f32 %v1545, %v452
      %v1557 = vmul.f32 %v1552, %v440
      %v1558 = vmul.f32 %v1550, %v444
      %v1559 = vmul.f32 %v1548, %v448
      %v1560 = vmul.f32 %v1546, %v452
      %1561 = vrot.lane.b32.xlu0 %v1447, 65
      %v1562 = vpop.permute.xlu0 %1561
      %1563 = vrot.lane.b32.xlu0 %v1451, 65
      %v1564 = vpop.permute.xlu0 %1563
      %1565 = vrot.lane.b32.xlu0 %v1448, 65
      %v1566 = vpop.permute.xlu0 %1565
      %1567 = vrot.lane.b32.xlu0 %v1452, 65
      %v1568 = vpop.permute.xlu0 %1567
      %1569 = vrot.lane.b32.xlu0 %v1449, 65
      %v1570 = vpop.permute.xlu0 %1569
      %1571 = vrot.lane.b32.xlu0 %v1453, 65
      %v1572 = vpop.permute.xlu0 %1571
      %1573 = vrot.lane.b32.xlu0 %v1450, 65
      %v1574 = vpop.permute.xlu0 %1573
      %1575 = vrot.lane.b32.xlu0 %v1454, 65
      %v1576 = vpop.permute.xlu0 %1575
      %v1577 = vsel %vm469, %v1570, %v1574
      %v1578 = vsel %vm469, %v1572, %v1576
      %v1579 = vsel %vm469, %v1566, %v1570
      %v1580 = vsel %vm469, %v1568, %v1572
      %v1581 = vsel %vm469, %v1562, %v1566
      %v1582 = vsel %vm469, %v1564, %v1568
      %v1583 = vsel %vm469, %v1574, %v1562
      %v1584 = vsel %vm469, %v1576, %v1564
      %v1585 = vmul.f32 %v1583, %v478
      %v1586 = vmul.f32 %v1581, %v482
      %v1587 = vmul.f32 %v1579, %v486
      %v1588 = vmul.f32 %v1577, %v490
      %v1589 = vmul.f32 %v1584, %v478
      %v1590 = vmul.f32 %v1582, %v482
      %v1591 = vmul.f32 %v1580, %v486
      %v1592 = vmul.f32 %v1578, %v490
      %1593 = vrot.lane.b32.xlu0 %v1447, 64
      %v1594 = vpop.permute.xlu0 %1593
      %1595 = vrot.lane.b32.xlu0 %v1451, 64
      %v1596 = vpop.permute.xlu0 %1595
      %1597 = vrot.lane.b32.xlu0 %v1448, 64
      %v1598 = vpop.permute.xlu0 %1597
      %1599 = vrot.lane.b32.xlu0 %v1452, 64
      %v1600 = vpop.permute.xlu0 %1599
      %1601 = vrot.lane.b32.xlu0 %v1449, 64
      %v1602 = vpop.permute.xlu0 %1601
      %1603 = vrot.lane.b32.xlu0 %v1453, 64
      %v1604 = vpop.permute.xlu0 %1603
      %1605 = vrot.lane.b32.xlu0 %v1450, 64
      %v1606 = vpop.permute.xlu0 %1605
      %1607 = vrot.lane.b32.xlu0 %v1454, 64
      %v1608 = vpop.permute.xlu0 %1607
      %v1609 = vsel %vm507, %v1602, %v1606
      %v1610 = vsel %vm507, %v1604, %v1608
      %v1611 = vsel %vm507, %v1598, %v1602
      %v1612 = vsel %vm507, %v1600, %v1604
      %v1613 = vsel %vm507, %v1594, %v1598
      %v1614 = vsel %vm507, %v1596, %v1600
      %v1615 = vsel %vm507, %v1606, %v1594
      %v1616 = vsel %vm507, %v1608, %v1596
      %v1617 = vmul.f32 %v1615, %v516
      %v1618 = vmul.f32 %v1613, %v520
      %v1619 = vmul.f32 %v1611, %v524
      %v1620 = vmul.f32 %v1609, %v528
      %v1621 = vmul.f32 %v1616, %v516
      %v1622 = vmul.f32 %v1614, %v520
      %v1623 = vmul.f32 %v1612, %v524
      %v1624 = vmul.f32 %v1610, %v528
      %1625 = vrot.lane.b32.xlu0 %v1447, 63
      %v1626 = vpop.permute.xlu0 %1625
      %1627 = vrot.lane.b32.xlu0 %v1451, 63
      %v1628 = vpop.permute.xlu0 %1627
      %1629 = vrot.lane.b32.xlu0 %v1448, 63
      %v1630 = vpop.permute.xlu0 %1629
      %1631 = vrot.lane.b32.xlu0 %v1452, 63
      %v1632 = vpop.permute.xlu0 %1631
      %1633 = vrot.lane.b32.xlu0 %v1449, 63
      %v1634 = vpop.permute.xlu0 %1633
      %1635 = vrot.lane.b32.xlu0 %v1453, 63
      %v1636 = vpop.permute.xlu0 %1635
      %1637 = vrot.lane.b32.xlu0 %v1450, 63
      %v1638 = vpop.permute.xlu0 %1637
      %1639 = vrot.lane.b32.xlu0 %v1454, 63
      %v1640 = vpop.permute.xlu0 %1639
      %v1641 = vsel %vm545, %v1634, %v1638
      %v1642 = vsel %vm545, %v1636, %v1640
      %v1643 = vsel %vm545, %v1630, %v1634
      %v1644 = vsel %vm545, %v1632, %v1636
      %v1645 = vsel %vm545, %v1626, %v1630
      %v1646 = vsel %vm545, %v1628, %v1632
      %v1647 = vsel %vm545, %v1638, %v1626
      %v1648 = vsel %vm545, %v1640, %v1628
      %v1649 = vmul.f32 %v1647, %v554
      %v1650 = vmul.f32 %v1645, %v558
      %v1651 = vmul.f32 %v1643, %v562
      %v1652 = vmul.f32 %v1641, %v566
      %v1653 = vmul.f32 %v1648, %v554
      %v1654 = vmul.f32 %v1646, %v558
      %v1655 = vmul.f32 %v1644, %v562
      %v1656 = vmul.f32 %v1642, %v566
      %1657 = vrot.lane.b32.xlu0 %v1447, 57
      %v1658 = vpop.permute.xlu0 %1657
      %1659 = vrot.lane.b32.xlu0 %v1451, 57
      %v1660 = vpop.permute.xlu0 %1659
      %1661 = vrot.lane.b32.xlu0 %v1448, 57
      %v1662 = vpop.permute.xlu0 %1661
      %1663 = vrot.lane.b32.xlu0 %v1452, 57
      %v1664 = vpop.permute.xlu0 %1663
      %1665 = vrot.lane.b32.xlu0 %v1449, 57
      %v1666 = vpop.permute.xlu0 %1665
      %1667 = vrot.lane.b32.xlu0 %v1453, 57
      %v1668 = vpop.permute.xlu0 %1667
      %1669 = vrot.lane.b32.xlu0 %v1450, 57
      %v1670 = vpop.permute.xlu0 %1669
      %1671 = vrot.lane.b32.xlu0 %v1454, 57
      %v1672 = vpop.permute.xlu0 %1671
      %v1673 = vsel %vm583, %v1666, %v1670
      %v1674 = vsel %vm583, %v1668, %v1672
      %v1675 = vsel %vm583, %v1662, %v1666
      %v1676 = vsel %vm583, %v1664, %v1668
      %v1677 = vsel %vm583, %v1658, %v1662
      %v1678 = vsel %vm583, %v1660, %v1664
      %v1679 = vsel %vm583, %v1670, %v1658
      %v1680 = vsel %vm583, %v1672, %v1660
      %v1681 = vmul.f32 %v1679, %v592
      %v1682 = vmul.f32 %v1677, %v596
      %v1683 = vmul.f32 %v1675, %v600
      %v1684 = vmul.f32 %v1673, %v604
      %v1685 = vmul.f32 %v1680, %v592
      %v1686 = vmul.f32 %v1678, %v596
      %v1687 = vmul.f32 %v1676, %v600
      %v1688 = vmul.f32 %v1674, %v604
      %1689 = vrot.lane.b32.xlu0 %v1447, 56
      %v1690 = vpop.permute.xlu0 %1689
      %1691 = vrot.lane.b32.xlu0 %v1451, 56
      %v1692 = vpop.permute.xlu0 %1691
      %1693 = vrot.lane.b32.xlu0 %v1448, 56
      %v1694 = vpop.permute.xlu0 %1693
      %1695 = vrot.lane.b32.xlu0 %v1452, 56
      %v1696 = vpop.permute.xlu0 %1695
      %1697 = vrot.lane.b32.xlu0 %v1449, 56
      %v1698 = vpop.permute.xlu0 %1697
      %1699 = vrot.lane.b32.xlu0 %v1453, 56
      %v1700 = vpop.permute.xlu0 %1699
      %1701 = vrot.lane.b32.xlu0 %v1450, 56
      %v1702 = vpop.permute.xlu0 %1701
      %1703 = vrot.lane.b32.xlu0 %v1454, 56
      %v1704 = vpop.permute.xlu0 %1703
      %v1705 = vsel %vm621, %v1698, %v1702
      %v1706 = vsel %vm621, %v1700, %v1704
      %v1707 = vsel %vm621, %v1694, %v1698
      %v1708 = vsel %vm621, %v1696, %v1700
      %v1709 = vsel %vm621, %v1690, %v1694
      %v1710 = vsel %vm621, %v1692, %v1696
      %v1711 = vsel %vm621, %v1702, %v1690
      %v1712 = vsel %vm621, %v1704, %v1692
      %v1713 = vmul.f32 %v1711, %v630
      %v1714 = vmul.f32 %v1709, %v634
      %v1715 = vmul.f32 %v1707, %v638
      %v1716 = vmul.f32 %v1705, %v642
      %v1717 = vmul.f32 %v1712, %v630
      %v1718 = vmul.f32 %v1710, %v634
      %v1719 = vmul.f32 %v1708, %v638
      %v1720 = vmul.f32 %v1706, %v642
      %1721 = vrot.lane.b32.xlu0 %v1447, 55
      %v1722 = vpop.permute.xlu0 %1721
      %1723 = vrot.lane.b32.xlu0 %v1451, 55
      %v1724 = vpop.permute.xlu0 %1723
      %1725 = vrot.lane.b32.xlu0 %v1448, 55
      %v1726 = vpop.permute.xlu0 %1725
      %1727 = vrot.lane.b32.xlu0 %v1452, 55
      %v1728 = vpop.permute.xlu0 %1727
      %1729 = vrot.lane.b32.xlu0 %v1449, 55
      %v1730 = vpop.permute.xlu0 %1729
      %1731 = vrot.lane.b32.xlu0 %v1453, 55
      %v1732 = vpop.permute.xlu0 %1731
      %1733 = vrot.lane.b32.xlu0 %v1450, 55
      %v1734 = vpop.permute.xlu0 %1733
      %1735 = vrot.lane.b32.xlu0 %v1454, 55
      %v1736 = vpop.permute.xlu0 %1735
      %v1737 = vsel %vm659, %v1730, %v1734
      %v1738 = vsel %vm659, %v1732, %v1736
      %v1739 = vsel %vm659, %v1726, %v1730
      %v1740 = vsel %vm659, %v1728, %v1732
      %v1741 = vsel %vm659, %v1722, %v1726
      %v1742 = vsel %vm659, %v1724, %v1728
      %v1743 = vsel %vm659, %v1734, %v1722
      %v1744 = vsel %vm659, %v1736, %v1724
      %v1745 = vmul.f32 %v1743, %v668
      %v1746 = vmul.f32 %v1741, %v672
      %v1747 = vmul.f32 %v1739, %v676
      %v1748 = vmul.f32 %v1737, %v680
      %v1749 = vmul.f32 %v1744, %v668
      %v1750 = vmul.f32 %v1742, %v672
      %v1751 = vmul.f32 %v1740, %v676
      %v1752 = vmul.f32 %v1738, %v680
      %1753 = vrot.lane.b32.xlu0 %v1447, 9
      %v1754 = vpop.permute.xlu0 %1753
      %1755 = vrot.lane.b32.xlu0 %v1451, 9
      %v1756 = vpop.permute.xlu0 %1755
      %1757 = vrot.lane.b32.xlu0 %v1448, 9
      %v1758 = vpop.permute.xlu0 %1757
      %1759 = vrot.lane.b32.xlu0 %v1452, 9
      %v1760 = vpop.permute.xlu0 %1759
      %1761 = vrot.lane.b32.xlu0 %v1449, 9
      %v1762 = vpop.permute.xlu0 %1761
      %1763 = vrot.lane.b32.xlu0 %v1453, 9
      %v1764 = vpop.permute.xlu0 %1763
      %1765 = vrot.lane.b32.xlu0 %v1450, 9
      %v1766 = vpop.permute.xlu0 %1765
      %1767 = vrot.lane.b32.xlu0 %v1454, 9
      %v1768 = vpop.permute.xlu0 %1767
      %v1769 = vsel %vm697, %v1762, %v1766
      %v1770 = vsel %vm697, %v1764, %v1768
      %v1771 = vsel %vm697, %v1758, %v1762
      %v1772 = vsel %vm697, %v1760, %v1764
      %v1773 = vsel %vm697, %v1754, %v1758
      %v1774 = vsel %vm697, %v1756, %v1760
      %v1775 = vsel %vm697, %v1766, %v1754
      %v1776 = vsel %vm697, %v1768, %v1756
      %v1777 = vmul.f32 %v1775, %v706
      %v1778 = vmul.f32 %v1773, %v710
      %v1779 = vmul.f32 %v1771, %v714
      %v1780 = vmul.f32 %v1769, %v718
      %v1781 = vmul.f32 %v1776, %v706
      %v1782 = vmul.f32 %v1774, %v710
      %v1783 = vmul.f32 %v1772, %v714
      %v1784 = vmul.f32 %v1770, %v718
      %1785 = vrot.lane.b32.xlu0 %v1447, 8
      %v1786 = vpop.permute.xlu0 %1785
      %1787 = vrot.lane.b32.xlu0 %v1451, 8
      %v1788 = vpop.permute.xlu0 %1787
      %1789 = vrot.lane.b32.xlu0 %v1448, 8
      %v1790 = vpop.permute.xlu0 %1789
      %1791 = vrot.lane.b32.xlu0 %v1452, 8
      %v1792 = vpop.permute.xlu0 %1791
      %1793 = vrot.lane.b32.xlu0 %v1449, 8
      %v1794 = vpop.permute.xlu0 %1793
      %1795 = vrot.lane.b32.xlu0 %v1453, 8
      %v1796 = vpop.permute.xlu0 %1795
      %1797 = vrot.lane.b32.xlu0 %v1450, 8
      %v1798 = vpop.permute.xlu0 %1797
      %1799 = vrot.lane.b32.xlu0 %v1454, 8
      %v1800 = vpop.permute.xlu0 %1799
      %v1801 = vsel %vm735, %v1794, %v1798
      %v1802 = vsel %vm735, %v1796, %v1800
      %v1803 = vsel %vm735, %v1790, %v1794
      %v1804 = vsel %vm735, %v1792, %v1796
      %v1805 = vsel %vm735, %v1786, %v1790
      %v1806 = vsel %vm735, %v1788, %v1792
      %v1807 = vsel %vm735, %v1798, %v1786
      %v1808 = vsel %vm735, %v1800, %v1788
      %v1809 = vmul.f32 %v1807, %v744
      %v1810 = vmul.f32 %v1805, %v748
      %v1811 = vmul.f32 %v1803, %v752
      %v1812 = vmul.f32 %v1801, %v756
      %v1813 = vmul.f32 %v1808, %v744
      %v1814 = vmul.f32 %v1806, %v748
      %v1815 = vmul.f32 %v1804, %v752
      %v1816 = vmul.f32 %v1802, %v756
      %1817 = vrot.lane.b32.xlu0 %v1447, 7
      %v1818 = vpop.permute.xlu0 %1817
      %1819 = vrot.lane.b32.xlu0 %v1451, 7
      %v1820 = vpop.permute.xlu0 %1819
      %1821 = vrot.lane.b32.xlu0 %v1448, 7
      %v1822 = vpop.permute.xlu0 %1821
      %1823 = vrot.lane.b32.xlu0 %v1452, 7
      %v1824 = vpop.permute.xlu0 %1823
      %1825 = vrot.lane.b32.xlu0 %v1449, 7
      %v1826 = vpop.permute.xlu0 %1825
      %1827 = vrot.lane.b32.xlu0 %v1453, 7
      %v1828 = vpop.permute.xlu0 %1827
      %1829 = vrot.lane.b32.xlu0 %v1450, 7
      %v1830 = vpop.permute.xlu0 %1829
      %1831 = vrot.lane.b32.xlu0 %v1454, 7
      %v1832 = vpop.permute.xlu0 %1831
      %v1833 = vsel %vm773, %v1826, %v1830
      %v1834 = vsel %vm773, %v1828, %v1832
      %v1835 = vsel %vm773, %v1822, %v1826
      %v1836 = vsel %vm773, %v1824, %v1828
      %v1837 = vsel %vm773, %v1818, %v1822
      %v1838 = vsel %vm773, %v1820, %v1824
      %v1839 = vsel %vm773, %v1830, %v1818
      %v1840 = vsel %vm773, %v1832, %v1820
      %v1841 = vmul.f32 %v1839, %v782
      %v1842 = vmul.f32 %v1837, %v786
      %v1843 = vmul.f32 %v1835, %v790
      %v1844 = vmul.f32 %v1833, %v794
      %v1845 = vmul.f32 %v1840, %v782
      %v1846 = vmul.f32 %v1838, %v786
      %v1847 = vmul.f32 %v1836, %v790
      %v1848 = vmul.f32 %v1834, %v794
      %1849 = vrot.lane.b32.xlu0 %v1447, 1
      %v1850 = vpop.permute.xlu0 %1849
      %1851 = vrot.lane.b32.xlu0 %v1451, 1
      %v1852 = vpop.permute.xlu0 %1851
      %1853 = vrot.lane.b32.xlu0 %v1448, 1
      %v1854 = vpop.permute.xlu0 %1853
      %1855 = vrot.lane.b32.xlu0 %v1452, 1
      %v1856 = vpop.permute.xlu0 %1855
      %1857 = vrot.lane.b32.xlu0 %v1449, 1
      %v1858 = vpop.permute.xlu0 %1857
      %1859 = vrot.lane.b32.xlu0 %v1453, 1
      %v1860 = vpop.permute.xlu0 %1859
      %1861 = vrot.lane.b32.xlu0 %v1450, 1
      %v1862 = vpop.permute.xlu0 %1861
      %1863 = vrot.lane.b32.xlu0 %v1454, 1
      %v1864 = vpop.permute.xlu0 %1863
      %v1865 = vsel %vm811, %v1858, %v1862
      %v1866 = vsel %vm811, %v1860, %v1864
      %v1867 = vsel %vm811, %v1854, %v1858
      %v1868 = vsel %vm811, %v1856, %v1860
      %v1869 = vsel %vm811, %v1850, %v1854
      %v1870 = vsel %vm811, %v1852, %v1856
      %v1871 = vsel %vm811, %v1862, %v1850
      %v1872 = vsel %vm811, %v1864, %v1852
      %v1873 = vmul.f32 %v1871, %v820
      %v1874 = vmul.f32 %v1869, %v824
      %v1875 = vmul.f32 %v1867, %v828
      %v1876 = vmul.f32 %v1865, %v832
      %v1877 = vmul.f32 %v1872, %v820
      %v1878 = vmul.f32 %v1870, %v824
      %v1879 = vmul.f32 %v1868, %v828
      %v1880 = vmul.f32 %v1866, %v832
      %1881 = vrot.lane.b32.xlu0 %v1447, 127
      %v1882 = vpop.permute.xlu0 %1881
      %1883 = vrot.lane.b32.xlu0 %v1451, 127
      %v1884 = vpop.permute.xlu0 %1883
      %1885 = vrot.lane.b32.xlu0 %v1448, 127
      %v1886 = vpop.permute.xlu0 %1885
      %1887 = vrot.lane.b32.xlu0 %v1452, 127
      %v1888 = vpop.permute.xlu0 %1887
      %1889 = vrot.lane.b32.xlu0 %v1449, 127
      %v1890 = vpop.permute.xlu0 %1889
      %1891 = vrot.lane.b32.xlu0 %v1453, 127
      %v1892 = vpop.permute.xlu0 %1891
      %1893 = vrot.lane.b32.xlu0 %v1450, 127
      %v1894 = vpop.permute.xlu0 %1893
      %1895 = vrot.lane.b32.xlu0 %v1454, 127
      %v1896 = vpop.permute.xlu0 %1895
      %v1897 = vsel %vm849, %v1890, %v1894
      %v1898 = vsel %vm849, %v1892, %v1896
      %v1899 = vsel %vm849, %v1886, %v1890
      %v1900 = vsel %vm849, %v1888, %v1892
      %v1901 = vsel %vm849, %v1882, %v1886
      %v1902 = vsel %vm849, %v1884, %v1888
      %v1903 = vsel %vm849, %v1894, %v1882
      %v1904 = vsel %vm849, %v1896, %v1884
      %v1905 = vmul.f32 %v1901, %v858
      %v1906 = vmul.f32 %v1899, %v862
      %v1907 = vmul.f32 %v1897, %v866
      %v1908 = vmul.f32 %v1903, %v870
      %v1909 = vmul.f32 %v1902, %v858
      %v1910 = vmul.f32 %v1900, %v862
      %v1911 = vmul.f32 %v1898, %v866
      %v1912 = vmul.f32 %v1904, %v870
      %1913 = vrot.lane.b32.xlu0 %v1447, 121
      %v1914 = vpop.permute.xlu0 %1913
      %1915 = vrot.lane.b32.xlu0 %v1451, 121
      %v1916 = vpop.permute.xlu0 %1915
      %1917 = vrot.lane.b32.xlu0 %v1448, 121
      %v1918 = vpop.permute.xlu0 %1917
      %1919 = vrot.lane.b32.xlu0 %v1452, 121
      %v1920 = vpop.permute.xlu0 %1919
      %1921 = vrot.lane.b32.xlu0 %v1449, 121
      %v1922 = vpop.permute.xlu0 %1921
      %1923 = vrot.lane.b32.xlu0 %v1453, 121
      %v1924 = vpop.permute.xlu0 %1923
      %1925 = vrot.lane.b32.xlu0 %v1450, 121
      %v1926 = vpop.permute.xlu0 %1925
      %1927 = vrot.lane.b32.xlu0 %v1454, 121
      %v1928 = vpop.permute.xlu0 %1927
      %v1929 = vsel %vm887, %v1922, %v1926
      %v1930 = vsel %vm887, %v1924, %v1928
      %v1931 = vsel %vm887, %v1918, %v1922
      %v1932 = vsel %vm887, %v1920, %v1924
      %v1933 = vsel %vm887, %v1914, %v1918
      %v1934 = vsel %vm887, %v1916, %v1920
      %v1935 = vsel %vm887, %v1926, %v1914
      %v1936 = vsel %vm887, %v1928, %v1916
      %v1937 = vmul.f32 %v1933, %v896
      %v1938 = vmul.f32 %v1931, %v900
      %v1939 = vmul.f32 %v1929, %v904
      %v1940 = vmul.f32 %v1935, %v908
      %v1941 = vmul.f32 %v1934, %v896
      %v1942 = vmul.f32 %v1932, %v900
      %v1943 = vmul.f32 %v1930, %v904
      %v1944 = vmul.f32 %v1936, %v908
      %1945 = vrot.lane.b32.xlu0 %v1447, 120
      %v1946 = vpop.permute.xlu0 %1945
      %1947 = vrot.lane.b32.xlu0 %v1451, 120
      %v1948 = vpop.permute.xlu0 %1947
      %1949 = vrot.lane.b32.xlu0 %v1448, 120
      %v1950 = vpop.permute.xlu0 %1949
      %1951 = vrot.lane.b32.xlu0 %v1452, 120
      %v1952 = vpop.permute.xlu0 %1951
      %1953 = vrot.lane.b32.xlu0 %v1449, 120
      %v1954 = vpop.permute.xlu0 %1953
      %1955 = vrot.lane.b32.xlu0 %v1453, 120
      %v1956 = vpop.permute.xlu0 %1955
      %1957 = vrot.lane.b32.xlu0 %v1450, 120
      %v1958 = vpop.permute.xlu0 %1957
      %1959 = vrot.lane.b32.xlu0 %v1454, 120
      %v1960 = vpop.permute.xlu0 %1959
      %v1961 = vsel %vm925, %v1954, %v1958
      %v1962 = vsel %vm925, %v1956, %v1960
      %v1963 = vsel %vm925, %v1950, %v1954
      %v1964 = vsel %vm925, %v1952, %v1956
      %v1965 = vsel %vm925, %v1946, %v1950
      %v1966 = vsel %vm925, %v1948, %v1952
      %v1967 = vsel %vm925, %v1958, %v1946
      %v1968 = vsel %vm925, %v1960, %v1948
      %v1969 = vmul.f32 %v1965, %v934
      %v1970 = vmul.f32 %v1963, %v938
      %v1971 = vmul.f32 %v1961, %v942
      %v1972 = vmul.f32 %v1967, %v946
      %v1973 = vmul.f32 %v1966, %v934
      %v1974 = vmul.f32 %v1964, %v938
      %v1975 = vmul.f32 %v1962, %v942
      %v1976 = vmul.f32 %v1968, %v946
      %1977 = vrot.lane.b32.xlu0 %v1447, 119
      %v1978 = vpop.permute.xlu0 %1977
      %1979 = vrot.lane.b32.xlu0 %v1451, 119
      %v1980 = vpop.permute.xlu0 %1979
      %1981 = vrot.lane.b32.xlu0 %v1448, 119
      %v1982 = vpop.permute.xlu0 %1981
      %1983 = vrot.lane.b32.xlu0 %v1452, 119
      %v1984 = vpop.permute.xlu0 %1983
      %1985 = vrot.lane.b32.xlu0 %v1449, 119
      %v1986 = vpop.permute.xlu0 %1985
      %1987 = vrot.lane.b32.xlu0 %v1453, 119
      %v1988 = vpop.permute.xlu0 %1987
      %1989 = vrot.lane.b32.xlu0 %v1450, 119
      %v1990 = vpop.permute.xlu0 %1989
      %1991 = vrot.lane.b32.xlu0 %v1454, 119
      %v1992 = vpop.permute.xlu0 %1991
      %v1993 = vsel %vm963, %v1986, %v1990
      %v1994 = vsel %vm963, %v1988, %v1992
      %v1995 = vsel %vm963, %v1982, %v1986
      %v1996 = vsel %vm963, %v1984, %v1988
      %v1997 = vsel %vm963, %v1978, %v1982
      %v1998 = vsel %vm963, %v1980, %v1984
      %v1999 = vsel %vm963, %v1990, %v1978
      %v2000 = vsel %vm963, %v1992, %v1980
      %v2001 = vmul.f32 %v1997, %v972
      %v2002 = vmul.f32 %v1995, %v976
      %v2003 = vmul.f32 %v1993, %v980
      %v2004 = vmul.f32 %v1999, %v984
      %v2005 = vmul.f32 %v1998, %v972
      %v2006 = vmul.f32 %v1996, %v976
      %v2007 = vmul.f32 %v1994, %v980
      %v2008 = vmul.f32 %v2000, %v984
      %v2009 = vmul.f32 %v1485, %v997
      %v2010 = vmul.f32 %v1483, %v1001
      %v2011 = vmul.f32 %v1481, %v1005
      %v2012 = vmul.f32 %v1487, %v1009
      %v2013 = vmul.f32 %v1486, %v997
      %v2014 = vmul.f32 %v1484, %v1001
      %v2015 = vmul.f32 %v1482, %v1005
      %v2016 = vmul.f32 %v1488, %v1009
      %v2017 = vmul.f32 %v1517, %v1022
      %v2018 = vmul.f32 %v1515, %v1026
      %v2019 = vmul.f32 %v1513, %v1030
      %v2020 = vmul.f32 %v1519, %v1034
      %v2021 = vmul.f32 %v1518, %v1022
      %v2022 = vmul.f32 %v1516, %v1026
      %v2023 = vmul.f32 %v1514, %v1030
      %v2024 = vmul.f32 %v1520, %v1034
      %v2025 = vmul.f32 %v1549, %v1047
      %v2026 = vmul.f32 %v1547, %v1051
      %v2027 = vmul.f32 %v1545, %v1055
      %v2028 = vmul.f32 %v1551, %v1059
      %v2029 = vmul.f32 %v1550, %v1047
      %v2030 = vmul.f32 %v1548, %v1051
      %v2031 = vmul.f32 %v1546, %v1055
      %v2032 = vmul.f32 %v1552, %v1059
      %v2033 = vmul.f32 %v1581, %v1072
      %v2034 = vmul.f32 %v1579, %v1076
      %v2035 = vmul.f32 %v1577, %v1080
      %v2036 = vmul.f32 %v1583, %v1084
      %v2037 = vmul.f32 %v1582, %v1072
      %v2038 = vmul.f32 %v1580, %v1076
      %v2039 = vmul.f32 %v1578, %v1080
      %v2040 = vmul.f32 %v1584, %v1084
      %v2041 = vmul.f32 %v1613, %v1097
      %v2042 = vmul.f32 %v1611, %v1101
      %v2043 = vmul.f32 %v1609, %v1105
      %v2044 = vmul.f32 %v1615, %v1109
      %v2045 = vmul.f32 %v1614, %v1097
      %v2046 = vmul.f32 %v1612, %v1101
      %v2047 = vmul.f32 %v1610, %v1105
      %v2048 = vmul.f32 %v1616, %v1109
      %v2049 = vmul.f32 %v1645, %v1122
      %v2050 = vmul.f32 %v1643, %v1126
      %v2051 = vmul.f32 %v1641, %v1130
      %v2052 = vmul.f32 %v1647, %v1134
      %v2053 = vmul.f32 %v1646, %v1122
      %v2054 = vmul.f32 %v1644, %v1126
      %v2055 = vmul.f32 %v1642, %v1130
      %v2056 = vmul.f32 %v1648, %v1134
      %v2057 = vmul.f32 %v1677, %v1147
      %v2058 = vmul.f32 %v1675, %v1151
      %v2059 = vmul.f32 %v1673, %v1155
      %v2060 = vmul.f32 %v1679, %v1159
      %v2061 = vmul.f32 %v1678, %v1147
      %v2062 = vmul.f32 %v1676, %v1151
      %v2063 = vmul.f32 %v1674, %v1155
      %v2064 = vmul.f32 %v1680, %v1159
      %v2065 = vmul.f32 %v1709, %v1172
      %v2066 = vmul.f32 %v1707, %v1176
      %v2067 = vmul.f32 %v1705, %v1180
      %v2068 = vmul.f32 %v1711, %v1184
      %v2069 = vmul.f32 %v1710, %v1172
      %v2070 = vmul.f32 %v1708, %v1176
      %v2071 = vmul.f32 %v1706, %v1180
      %v2072 = vmul.f32 %v1712, %v1184
      %v2073 = vmul.f32 %v1741, %v1197
      %v2074 = vmul.f32 %v1739, %v1201
      %v2075 = vmul.f32 %v1737, %v1205
      %v2076 = vmul.f32 %v1743, %v1209
      %v2077 = vmul.f32 %v1742, %v1197
      %v2078 = vmul.f32 %v1740, %v1201
      %v2079 = vmul.f32 %v1738, %v1205
      %v2080 = vmul.f32 %v1744, %v1209
      %2082 = vset.pattern.permute.xlu0 0
      %2083 = vperm.xlu0 %2082, %v1463
      %v2084 = vpop.permute.xlu0 %2083
      %2087 = vset.pattern.permute.xlu0 0
      %2088 = vperm.xlu0 %2087, %v1464
      %v2089 = vpop.permute.xlu0 %2088
      %vm2091 = vcmask 392192
      %v2093 = vsel %vm2091, %v1458, 0
      %v2096 = vsel %vm2091, %v1462, 0
      %2098 = vmatprep.subr.mxu0 %v1718
      %2099 = vmatpush1.msra.mxu0 %v1717
      %2100 = vmatprep.subr.mxu0 %v1714
      %2101 = vmatpush1.msra.mxu0 %v1713
      %2102 = vmatprep.subr.mxu0 %v1686
      %2103 = vmatpush1.msra.mxu0 %v1685
      %2104 = vmatprep.subr.mxu0 %v1682
      %2105 = vmatpush1.msra.mxu0 %v1681
      %2106 = vmatprep.subr.mxu0 %v1654
      %2107 = vmatpush1.msra.mxu0 %v1653
      %2108 = vmatprep.subr.mxu0 %v1650
      %2109 = vmatpush1.msra.mxu0 %v1649
      %2110 = vmatprep.subr.mxu0 %v1622
      %2111 = vmatpush1.msra.mxu0 %v1621
      %2112 = vmatprep.subr.mxu0 %v1618
      %2113 = vmatpush1.msra.mxu0 %v1617
      %2114 = vmatprep.subr.mxu0 %v1590
      %2115 = vmatpush1.msra.mxu0 %v1589
      %2116 = vmatprep.subr.mxu0 %v1586
      %2117 = vmatpush1.msra.mxu0 %v1585
      %2118 = vmatprep.subr.mxu0 %v1558
      %2119 = vmatpush1.msra.mxu0 %v1557
      %2120 = vmatprep.subr.mxu0 %v1554
      %2121 = vmatpush1.msra.mxu0 %v1553
      %2122 = vmatprep.subr.mxu0 %v1526
      %2123 = vmatpush1.msra.mxu0 %v1525
      %2124 = vmatprep.subr.mxu0 %v1522
      %2125 = vmatpush1.msra.mxu0 %v1521
      %2126 = vmatprep.subr.mxu0 %v1494
      %2127 = vmatpush1.msra.mxu0 %v1493
      %2128 = vmatprep.subr.mxu0 %v1490
      %2129 = vmatpush1.msra.mxu0 %v1489
      %2130 = vmatprep.subr.mxu0 %v1942
      %2131 = vmatpush2.msra.mxu0 %v1941
      %2132 = vmatprep.subr.mxu0 %v1938
      %2133 = vmatpush2.msra.mxu0 %v1937
      %2134 = vmatprep.subr.mxu0 %v1910
      %2135 = vmatpush2.msra.mxu0 %v1909
      %2136 = vmatprep.subr.mxu0 %v1906
      %2137 = vmatpush2.msra.mxu0 %v1905
      %2138 = vmatprep.subr.mxu0 %v1452
      %2139 = vmatpush2.msra.mxu0 %v1451
      %2140 = vmatprep.subr.mxu0 %v1448
      %2141 = vmatpush2.msra.mxu0 %v1447
      %2142 = vmatprep.subr.mxu0 %v1878
      %2143 = vmatpush2.msra.mxu0 %v1877
      %2144 = vmatprep.subr.mxu0 %v1874
      %2145 = vmatpush2.msra.mxu0 %v1873
      %2146 = vmatprep.subr.mxu0 %v1846
      %2147 = vmatpush2.msra.mxu0 %v1845
      %2148 = vmatprep.subr.mxu0 %v1842
      %2149 = vmatpush2.msra.mxu0 %v1841
      %2150 = vmatprep.subr.mxu0 %v1814
      %2151 = vmatpush2.msra.mxu0 %v1813
      %2152 = vmatprep.subr.mxu0 %v1810
      %2153 = vmatpush2.msra.mxu0 %v1809
      %2154 = vmatprep.subr.mxu0 %v1782
      %2155 = vmatpush2.msra.mxu0 %v1781
      %2156 = vmatprep.subr.mxu0 %v1778
      %2157 = vmatpush2.msra.mxu0 %v1777
      %2158 = vmatprep.subr.mxu0 %v1750
      %2159 = vmatpush2.msra.mxu0 %v1749
      %2160 = vmatprep.subr.mxu0 %v1746
      %2161 = vmatpush2.msra.mxu0 %v1745
      %2162 = vmatprep.mubr.f32.mxu0 %v1456
      %2163 = vmatmul.mubr.f32.gmra.mxu0 %v1455
      %v2164 = vpop.f32.mrf.mxu0
      %v2165 = vadd.f32 %v2084, %v2164
      %v2166 = vpop.f32.mrf.mxu0
      %v2167 = vadd.f32 %v2084, %v2166
      %2168 = vmatprep.mubr.f32.mxu0 %v1460
      %2169 = vmatmul.mubr.f32.gmra.mxu0 %v1459
      %v2170 = vpop.f32.mrf.mxu0
      %v2171 = vadd.f32 %v2089, %v2170
      %v2172 = vpop.f32.mrf.mxu0
      %v2173 = vadd.f32 %v2089, %v2172
      %2174 = vdwg.mxu0
      %2175 = vmatprep.subr.mxu0 %v2054
      %2176 = vmatpush1.msra.mxu0 %v2053
      %2177 = vmatprep.subr.mxu0 %v2050
      %2178 = vmatpush1.msra.mxu0 %v2049
      %2179 = vmatprep.subr.mxu0 %v2046
      %2180 = vmatpush1.msra.mxu0 %v2045
      %2181 = vmatprep.subr.mxu0 %v2042
      %2182 = vmatpush1.msra.mxu0 %v2041
      %2183 = vmatprep.subr.mxu0 %v2038
      %2184 = vmatpush1.msra.mxu0 %v2037
      %2185 = vmatprep.subr.mxu0 %v2034
      %2186 = vmatpush1.msra.mxu0 %v2033
      %2187 = vmatprep.subr.mxu0 %v2030
      %2188 = vmatpush1.msra.mxu0 %v2029
      %2189 = vmatprep.subr.mxu0 %v2026
      %2190 = vmatpush1.msra.mxu0 %v2025
      %2191 = vmatprep.subr.mxu0 %v2022
      %2192 = vmatpush1.msra.mxu0 %v2021
      %2193 = vmatprep.subr.mxu0 %v2018
      %2194 = vmatpush1.msra.mxu0 %v2017
      %2195 = vmatprep.subr.mxu0 %v2014
      %2196 = vmatpush1.msra.mxu0 %v2013
      %2197 = vmatprep.subr.mxu0 %v2010
      %2198 = vmatpush1.msra.mxu0 %v2009
      %2199 = vmatprep.subr.mxu0 %v2006
      %2200 = vmatpush1.msra.mxu0 %v2005
      %2201 = vmatprep.subr.mxu0 %v2002
      %2202 = vmatpush1.msra.mxu0 %v2001
      %2203 = vmatprep.subr.mxu0 %v1974
      %2204 = vmatpush1.msra.mxu0 %v1973
      %2205 = vmatprep.subr.mxu0 %v1970
      %2206 = vmatpush1.msra.mxu0 %v1969
      %2207 = vmatprep.subr.mxu0 0.0
      %2208 = vmatpush2.msra.mxu0 0.0
      %2209 = vmatprep.subr.mxu0 0.0
      %2210 = vmatpush2.msra.mxu0 0.0
      %2211 = vmatprep.subr.mxu0 0.0
      %2212 = vmatpush2.msra.mxu0 0.0
      %2213 = vmatprep.subr.mxu0 0.0
      %2214 = vmatpush2.msra.mxu0 0.0
      %2215 = vmatprep.subr.mxu0 0.0
      %2216 = vmatpush2.msra.mxu0 0.0
      %2217 = vmatprep.subr.mxu0 0.0
      %2218 = vmatpush2.msra.mxu0 0.0
      %2219 = vmatprep.subr.mxu0 0.0
      %2220 = vmatpush2.msra.mxu0 0.0
      %2221 = vmatprep.subr.mxu0 0.0
      %2222 = vmatpush2.msra.mxu0 0.0
      %2223 = vmatprep.subr.mxu0 0.0
      %2224 = vmatpush2.msra.mxu0 0.0
      %2225 = vmatprep.subr.mxu0 0.0
      %2226 = vmatpush2.msra.mxu0 0.0
      %2227 = vmatprep.subr.mxu0 %v2078
      %2228 = vmatpush2.msra.mxu0 %v2077
      %2229 = vmatprep.subr.mxu0 %v2074
      %2230 = vmatpush2.msra.mxu0 %v2073
      %2231 = vmatprep.subr.mxu0 %v2070
      %2232 = vmatpush2.msra.mxu0 %v2069
      %2233 = vmatprep.subr.mxu0 %v2066
      %2234 = vmatpush2.msra.mxu0 %v2065
      %2235 = vmatprep.subr.mxu0 %v2062
      %2236 = vmatpush2.msra.mxu0 %v2061
      %2237 = vmatprep.subr.mxu0 %v2058
      %2238 = vmatpush2.msra.mxu0 %v2057
      %2239 = vmatprep.mubr.f32.mxu0 %v2093
      %2240 = vmatmul.mubr.f32.gmra.mxu0 %v1457
      %v2241 = vpop.f32.mrf.mxu0
      %v2242 = vadd.f32 %v2165, %v2241
      %v2243 = vpop.f32.mrf.mxu0
      %v2244 = vadd.f32 %v2167, %v2243
      %2245 = vmatprep.mubr.f32.mxu0 %v2096
      %2246 = vmatmul.mubr.f32.gmra.mxu0 %v1461
      %v2247 = vpop.f32.mrf.mxu0
      %v2248 = vadd.f32 %v2171, %v2247
      %v2249 = vpop.f32.mrf.mxu0
      %v2250 = vadd.f32 %v2173, %v2249
      %2251 = vdwg.mxu0
      %2252 = vmatprep.subr.mxu0 %v1720
      %2253 = vmatpush1.msra.mxu0 %v1719
      %2254 = vmatprep.subr.mxu0 %v1716
      %2255 = vmatpush1.msra.mxu0 %v1715
      %2256 = vmatprep.subr.mxu0 %v1688
      %2257 = vmatpush1.msra.mxu0 %v1687
      %2258 = vmatprep.subr.mxu0 %v1684
      %2259 = vmatpush1.msra.mxu0 %v1683
      %2260 = vmatprep.subr.mxu0 %v1656
      %2261 = vmatpush1.msra.mxu0 %v1655
      %2262 = vmatprep.subr.mxu0 %v1652
      %2263 = vmatpush1.msra.mxu0 %v1651
      %2264 = vmatprep.subr.mxu0 %v1624
      %2265 = vmatpush1.msra.mxu0 %v1623
      %2266 = vmatprep.subr.mxu0 %v1620
      %2267 = vmatpush1.msra.mxu0 %v1619
      %2268 = vmatprep.subr.mxu0 %v1592
      %2269 = vmatpush1.msra.mxu0 %v1591
      %2270 = vmatprep.subr.mxu0 %v1588
      %2271 = vmatpush1.msra.mxu0 %v1587
      %2272 = vmatprep.subr.mxu0 %v1560
      %2273 = vmatpush1.msra.mxu0 %v1559
      %2274 = vmatprep.subr.mxu0 %v1556
      %2275 = vmatpush1.msra.mxu0 %v1555
      %2276 = vmatprep.subr.mxu0 %v1528
      %2277 = vmatpush1.msra.mxu0 %v1527
      %2278 = vmatprep.subr.mxu0 %v1524
      %2279 = vmatpush1.msra.mxu0 %v1523
      %2280 = vmatprep.subr.mxu0 %v1496
      %2281 = vmatpush1.msra.mxu0 %v1495
      %2282 = vmatprep.subr.mxu0 %v1492
      %2283 = vmatpush1.msra.mxu0 %v1491
      %2284 = vmatprep.subr.mxu0 %v1944
      %2285 = vmatpush2.msra.mxu0 %v1943
      %2286 = vmatprep.subr.mxu0 %v1940
      %2287 = vmatpush2.msra.mxu0 %v1939
      %2288 = vmatprep.subr.mxu0 %v1912
      %2289 = vmatpush2.msra.mxu0 %v1911
      %2290 = vmatprep.subr.mxu0 %v1908
      %2291 = vmatpush2.msra.mxu0 %v1907
      %2292 = vmatprep.subr.mxu0 %v1454
      %2293 = vmatpush2.msra.mxu0 %v1453
      %2294 = vmatprep.subr.mxu0 %v1450
      %2295 = vmatpush2.msra.mxu0 %v1449
      %2296 = vmatprep.subr.mxu0 %v1880
      %2297 = vmatpush2.msra.mxu0 %v1879
      %2298 = vmatprep.subr.mxu0 %v1876
      %2299 = vmatpush2.msra.mxu0 %v1875
      %2300 = vmatprep.subr.mxu0 %v1848
      %2301 = vmatpush2.msra.mxu0 %v1847
      %2302 = vmatprep.subr.mxu0 %v1844
      %2303 = vmatpush2.msra.mxu0 %v1843
      %2304 = vmatprep.subr.mxu0 %v1816
      %2305 = vmatpush2.msra.mxu0 %v1815
      %2306 = vmatprep.subr.mxu0 %v1812
      %2307 = vmatpush2.msra.mxu0 %v1811
      %2308 = vmatprep.subr.mxu0 %v1784
      %2309 = vmatpush2.msra.mxu0 %v1783
      %2310 = vmatprep.subr.mxu0 %v1780
      %2311 = vmatpush2.msra.mxu0 %v1779
      %2312 = vmatprep.subr.mxu0 %v1752
      %2313 = vmatpush2.msra.mxu0 %v1751
      %2314 = vmatprep.subr.mxu0 %v1748
      %2315 = vmatpush2.msra.mxu0 %v1747
      %2316 = vmatprep.mubr.f32.mxu0 %v1456
      %2317 = vmatmul.mubr.f32.gmra.mxu0 %v1455
      %v2318 = vpop.f32.mrf.mxu0
      %v2319 = vadd.f32 %v2084, %v2318
      %v2320 = vpop.f32.mrf.mxu0
      %v2321 = vadd.f32 %v2084, %v2320
      %2322 = vmatprep.mubr.f32.mxu0 %v1460
      %2323 = vmatmul.mubr.f32.gmra.mxu0 %v1459
      %v2324 = vpop.f32.mrf.mxu0
      %v2325 = vadd.f32 %v2089, %v2324
      %v2326 = vpop.f32.mrf.mxu0
      %v2327 = vadd.f32 %v2089, %v2326
      %2328 = vdwg.mxu0
      %2329 = vmatprep.subr.mxu0 %v2056
      %2330 = vmatpush1.msra.mxu0 %v2055
      %2331 = vmatprep.subr.mxu0 %v2052
      %2332 = vmatpush1.msra.mxu0 %v2051
      %2333 = vmatprep.subr.mxu0 %v2048
      %2334 = vmatpush1.msra.mxu0 %v2047
      %2335 = vmatprep.subr.mxu0 %v2044
      %2336 = vmatpush1.msra.mxu0 %v2043
      %2337 = vmatprep.subr.mxu0 %v2040
      %2338 = vmatpush1.msra.mxu0 %v2039
      %2339 = vmatprep.subr.mxu0 %v2036
      %2340 = vmatpush1.msra.mxu0 %v2035
      %2341 = vmatprep.subr.mxu0 %v2032
      %2342 = vmatpush1.msra.mxu0 %v2031
      %2343 = vmatprep.subr.mxu0 %v2028
      %2344 = vmatpush1.msra.mxu0 %v2027
      %2345 = vmatprep.subr.mxu0 %v2024
      %2346 = vmatpush1.msra.mxu0 %v2023
      %2347 = vmatprep.subr.mxu0 %v2020
      %2348 = vmatpush1.msra.mxu0 %v2019
      %2349 = vmatprep.subr.mxu0 %v2016
      %2350 = vmatpush1.msra.mxu0 %v2015
      %2351 = vmatprep.subr.mxu0 %v2012
      %2352 = vmatpush1.msra.mxu0 %v2011
      %2353 = vmatprep.subr.mxu0 %v2008
      %2354 = vmatpush1.msra.mxu0 %v2007
      %2355 = vmatprep.subr.mxu0 %v2004
      %2356 = vmatpush1.msra.mxu0 %v2003
      %2357 = vmatprep.subr.mxu0 %v1976
      %2358 = vmatpush1.msra.mxu0 %v1975
      %2359 = vmatprep.subr.mxu0 %v1972
      %2360 = vmatpush1.msra.mxu0 %v1971
      %2361 = vmatprep.subr.mxu0 0.0
      %2362 = vmatpush2.msra.mxu0 0.0
      %2363 = vmatprep.subr.mxu0 0.0
      %2364 = vmatpush2.msra.mxu0 0.0
      %2365 = vmatprep.subr.mxu0 0.0
      %2366 = vmatpush2.msra.mxu0 0.0
      %2367 = vmatprep.subr.mxu0 0.0
      %2368 = vmatpush2.msra.mxu0 0.0
      %2369 = vmatprep.subr.mxu0 0.0
      %2370 = vmatpush2.msra.mxu0 0.0
      %2371 = vmatprep.subr.mxu0 0.0
      %2372 = vmatpush2.msra.mxu0 0.0
      %2373 = vmatprep.subr.mxu0 0.0
      %2374 = vmatpush2.msra.mxu0 0.0
      %2375 = vmatprep.subr.mxu0 0.0
      %2376 = vmatpush2.msra.mxu0 0.0
      %2377 = vmatprep.subr.mxu0 0.0
      %2378 = vmatpush2.msra.mxu0 0.0
      %2379 = vmatprep.subr.mxu0 0.0
      %2380 = vmatpush2.msra.mxu0 0.0
      %2381 = vmatprep.subr.mxu0 %v2080
      %2382 = vmatpush2.msra.mxu0 %v2079
      %2383 = vmatprep.subr.mxu0 %v2076
      %2384 = vmatpush2.msra.mxu0 %v2075
      %2385 = vmatprep.subr.mxu0 %v2072
      %2386 = vmatpush2.msra.mxu0 %v2071
      %2387 = vmatprep.subr.mxu0 %v2068
      %2388 = vmatpush2.msra.mxu0 %v2067
      %2389 = vmatprep.subr.mxu0 %v2064
      %2390 = vmatpush2.msra.mxu0 %v2063
      %2391 = vmatprep.subr.mxu0 %v2060
      %2392 = vmatpush2.msra.mxu0 %v2059
      %2393 = vmatprep.mubr.f32.mxu0 %v2093
      %2394 = vmatmul.mubr.f32.gmra.mxu0 %v1457
      %v2395 = vpop.f32.mrf.mxu0
      %v2396 = vadd.f32 %v2319, %v2395
      %v2397 = vpop.f32.mrf.mxu0
      %v2398 = vadd.f32 %v2321, %v2397
      %2399 = vmatprep.mubr.f32.mxu0 %v2096
      %2400 = vmatmul.mubr.f32.gmra.mxu0 %v1461
      %v2401 = vpop.f32.mrf.mxu0
      %v2402 = vadd.f32 %v2325, %v2401
      %v2403 = vpop.f32.mrf.mxu0
      %v2404 = vadd.f32 %v2327, %v2403
      %2405 = vdwg.mxu0
      %v2406 = vadd.f32 %v2242, %v2244
      %v2407 = vadd.f32 %v2406, %v2396
      %v2408 = vadd.f32 %v2407, %v2398
      %2409 = vadd.xlane.f32.xlu0 %v2408
      %v2410 = vpop.xlane.xlu0 %2409
      %v2411 = vadd.f32 %v2248, %v2250
      %v2412 = vadd.f32 %v2411, %v2402
      %v2413 = vadd.f32 %v2412, %v2404
      %2414 = vadd.xlane.f32.xlu0 %v2413
      %v2415 = vpop.xlane.xlu0 %2414
      %v2416 = vmul.f32 %v2410, 0.001953125
      %v2417 = vmul.f32 %v2415, 0.001953125
      %v2418 = vmul.f32 %v2242, %v2242
      %v2419 = vmul.f32 %v2244, %v2244
      %v2420 = vmul.f32 %v2396, %v2396
      %v2421 = vmul.f32 %v2398, %v2398
      %v2422 = vmul.f32 %v2248, %v2248
      %v2423 = vmul.f32 %v2250, %v2250
      %v2424 = vmul.f32 %v2402, %v2402
      %v2425 = vmul.f32 %v2404, %v2404
      %v2426 = vadd.f32 %v2418, %v2419
      %v2427 = vadd.f32 %v2426, %v2420
      %v2428 = vadd.f32 %v2427, %v2421
      %2429 = vadd.xlane.f32.xlu0 %v2428
      %v2430 = vpop.xlane.xlu0 %2429
      %v2431 = vadd.f32 %v2422, %v2423
      %v2432 = vadd.f32 %v2431, %v2424
      %v2433 = vadd.f32 %v2432, %v2425
      %2434 = vadd.xlane.f32.xlu0 %v2433
      %v2435 = vpop.xlane.xlu0 %2434
      %v2436 = vmul.f32 %v2430, 0.001953125
      %v2437 = vmul.f32 %v2435, 0.001953125
      %v2438 = vmul.f32 %v2416, %v2416
      %v2439 = vmul.f32 %v2417, %v2417
      %v2440 = vsub.f32 %v2436, %v2438
      %v2441 = vsub.f32 %v2437, %v2439
      %v2442 = vmax.f32 %v2440, 0.0
      %v2443 = vmax.f32 %v2441, 0.0
      %v2444 = vsub.f32 %v2242, %v2416
      %v2445 = vsub.f32 %v2244, %v2416
      %v2446 = vsub.f32 %v2396, %v2416
      %v2447 = vsub.f32 %v2398, %v2416
      %v2448 = vsub.f32 %v2248, %v2417
      %v2449 = vsub.f32 %v2250, %v2417
      %v2450 = vsub.f32 %v2402, %v2417
      %v2451 = vsub.f32 %v2404, %v2417
      %v2452 = vadd.f32 %v2442, 1e-05
      %v2453 = vadd.f32 %v2443, 1e-05
      %v2454 = vrsqrt.pop %v2452
      %v2455 = vrsqrt.pop %v2453
      %v2456 = vmul.f32 %v2444, %v2454
      %v2457 = vmul.f32 %v2445, %v2454
      %v2458 = vmul.f32 %v2446, %v2454
      %v2459 = vmul.f32 %v2447, %v2454
      %v2460 = vmul.f32 %v2448, %v2455
      %v2461 = vmul.f32 %v2449, %v2455
      %v2462 = vmul.f32 %v2450, %v2455
      %v2463 = vmul.f32 %v2451, %v2455
      %v2464 = vmax.f32 %v2456, 0.0
      %v2465 = vmax.f32 %v2457, 0.0
      %v2466 = vmax.f32 %v2458, 0.0
      %v2467 = vmax.f32 %v2459, 0.0
      %v2468 = vmax.f32 %v2460, 0.0
      %v2469 = vmax.f32 %v2461, 0.0
      %v2470 = vmax.f32 %v2462, 0.0
      %v2471 = vmax.f32 %v2463, 0.0
      %2472 = vst [vmem:[%s251] sm:$0xff] %v2464
      %2473 = vst [vmem:[%s251 + $0x8] sm:$0xff] %v2465
      %2474 = vst [vmem:[%s251 + $0x10] sm:$0xff] %v2466
      %2475 = vst [vmem:[%s251 + $0x18] sm:$0xff] %v2467
      %2476 = vst [vmem:[%s251 + $0x20] sm:$0xff] %v2468
      %2477 = vst [vmem:[%s251 + $0x28] sm:$0xff] %v2469
      %2478 = vst [vmem:[%s251 + $0x30] sm:$0xff] %v2470
      %2479 = vst [vmem:[%s251 + $0x38] sm:$0xff] %v2471
      %p2480 = scmp.lt.s32.totalorder %s17, 1
      %s2481 = scalar_select %p2480, %s17, 1
      %s2482 = smul.addr %s2481, 8
      %s2483 = smul.addr %s2482, 8
      %s2484 = scalar_lea.vmem %s6, %s2483
      // Predicated region
      $region45: #{double_conv.1} parent=43 // pred_check
        %p2485 = pneg %p166
      $region46: #{double_conv.1} parent=43 // pred_check_branch
        %2487 = sbr.rel (%p2485) target = $region48
      $region47: #{double_conv.1} parent=43 // pred_region
        _
      $region48: #{double_conv.1} parent=43 // pred_fallthru
        _
    $region44: #{double_conv.1} parent=5 // pred_fallthru
      _
    %p2488 = scmp.le.s32.totalorder 2, %s12
    // Predicated region
    $region49: #{double_conv.1} parent=5 // pred_check
      %p2489 = pneg %p2488
    $region50: #{double_conv.1} parent=5 // pred_check_branch
      %2491 = sbr.rel (%p2489) target = $region52
    $region51: #{double_conv.1} parent=5 // pred_region
      %s2492 = ssub.s32 %s12, 2
      // Predicated region
      $region53: #{double_conv.1} parent=51 // pred_check
        %p2493 = pneg %p172
      $region54: #{double_conv.1} parent=51 // pred_check_branch
        %2495 = sbr.rel (%p2493) target = $region56
      $region55: #{double_conv.1} parent=51 // pred_region
        %p2496 = scmp.lt.s32.totalorder %s18, 1
        %s2497 = scalar_select %p2496, %s18, 1
        %s2498 = smul.addr %s2497, 8
        %s2499 = smul.addr %s2498, 8
        %s2500 = scalar_lea.vmem %s6, %s2499
      $region56: #{double_conv.1} parent=51 // pred_fallthru
        _
    $region52: #{double_conv.1} parent=5 // pred_fallthru
      _
  $region6: #{double_conv.1} parent=0 // loop_footer
    %s16 = sadd.s32 1, %s12
  $region7: #{double_conv.1} parent=0 // loop_footer_branch
    %11 = sbr.rel target = $region3
  $region8: #{double_conv.1} parent=0 // loop_exit
    _

</llo_original>
